<compile_context>
chip_gen: v5e
topology: v5e:2x2
jax: 0.10.0
libtpu: 0.0.40
codegen_flags: <defaults>
</compile_context>

<pallas_src>
import math

import jax
import jax.numpy as jnp
from jax import lax
from jax.experimental import pallas as pl
from jax.experimental.pallas import tpu as pltpu


def lstm_attn_kernel(
    x_ref,     # (T*B, D)   time-major flattened input
    wx_ref,    # (D, 8H)    [W_ih_fwd^T | W_ih_bwd^T], gate cols i|f|o|g
    bx_ref,    # (1, 8H)    fused biases, same column layout
    wh_ref,    # (2H, 8H)   block-diag(W_hh_fwd^T, W_hh_bwd^T), gate cols i|f|o|g
    aw_ref,    # (1, 2H)    attention linear weight
    ab_ref,    # (1, 1)     attention linear bias (SMEM scalar)
    ctx_ref,   # out: (B, 2H)
    attn_ref,  # out: (B, T)
    lo_ref,    # out: (B, T*2H)  lane-dense lstm_out slab
):
    B, T = attn_ref.shape
    H = ctx_ref.shape[1] // 2

    # ---- hoisted input projection: one MXU matmul for all timesteps & both
    # directions; biases folded in (rows t*B:(t+1)*B belong to timestep t).
    gx = (
        jnp.dot(x_ref[...], wx_ref[...], preferred_element_type=jnp.float32)
        + bx_ref[...]
    )  # (T*B, 8H)

    wh = wh_ref[...]  # loop-invariant block-diagonal recurrence weight (2H, 8H)

    def gate_apply(g, c):
        # Gate order i | f | o | g: one contiguous sigmoid slice + one tanh.
        sig = jax.nn.sigmoid(g[:, : 3 * H])
        gg = jnp.tanh(g[:, 3 * H:])
        i = sig[:, :H]
        f = sig[:, H: 2 * H]
        o = sig[:, 2 * H: 3 * H]
        c_new = f * c + i * gg
        h_new = o * jnp.tanh(c_new)
        return h_new, c_new

    zeros = jnp.zeros((B, H), jnp.float32)
    hf, cf = zeros, zeros          # forward  state (time t)
    hb, cb = zeros, zeros          # backward state (time T-1-t)
    hf_seq = []                    # hf_seq[t] = forward hidden at time t
    hb_seq = []                    # hb_seq[k] = backward hidden at time T-1-k

    # Static unroll of the short fixed recurrence; forward (time t) and
    # backward (time T-1-t) share a single fused block-diagonal recurrence dot.
    for t in range(T):
        tb = T - 1 - t
        g_f = gx[t * B:(t + 1) * B, : 4 * H]
        g_b = gx[tb * B:(tb + 1) * B, 4 * H:]
        if t > 0:  # at t == 0 the hidden states are zero: skip the dot
            rec = jnp.dot(
                jnp.concatenate([hf, hb], axis=1), wh,
                preferred_element_type=jnp.float32)          # (B, 8H)
            g_f = g_f + rec[:, : 4 * H]
            g_b = g_b + rec[:, 4 * H:]
        hf, cf = gate_apply(g_f, cf)
        hb, cb = gate_apply(g_b, cb)
        hf_seq.append(hf)
        hb_seq.append(hb)

    # ---- attention epilogue, entirely on register-resident values ----
    aw = aw_ref[...]               # (1, 2H)
    ab = ab_ref[0, 0]              # scalar (cancels in softmax; kept for parity)

    ho = []                        # ho[t] = lstm_out[:, t, :]  (B, 2H)
    score_cols = []
    for t in range(T):
        ho_t = jnp.concatenate([hf_seq[t], hb_seq[T - 1 - t]], axis=1)
        ho.append(ho_t)
        score_cols.append(jnp.sum(ho_t * aw, axis=1, keepdims=True))   # (B, 1)

    scores = jnp.concatenate(score_cols, axis=1) + ab         # (B, T)
    m = jnp.max(scores, axis=1, keepdims=True)
    e = jnp.exp(scores - m)
    attn = e / jnp.sum(e, axis=1, keepdims=True)               # exact softmax
    attn_ref[...] = attn

    ctx = attn[:, 0:1] * ho[0]
    for t in range(1, T):
        ctx = ctx + attn[:, t:t + 1] * ho[t]
    ctx_ref[...] = ctx                                          # (B, 2H)

    # Single lane-dense store of the whole trajectory.
    lo_ref[...] = jnp.concatenate(ho, axis=1)                   # (B, T*2H)


# --------------------------- wrapper / weight prep ---------------------------
def _reorder_gates(w):
    """Permute the trailing 4H gate axis from PyTorch order i|f|g|o to i|f|o|g."""
    i, f, g, o = jnp.split(w, 4, axis=-1)
    return jnp.concatenate([i, f, o, g], axis=-1)


def prepare_lstm_attention_params(w_ih_f, w_hh_f, b_ih_f, b_hh_f,
                                  w_ih_b, w_hh_b, b_ih_b, b_hh_b,
                                  attn_w, attn_b):
    """One-time fused weight layouts (do NOT recompute per forward call)."""
    H = w_hh_f.shape[1]
    f32 = jnp.float32

    wx = jnp.concatenate(
        [_reorder_gates(w_ih_f.T), _reorder_gates(w_ih_b.T)], axis=1
    ).astype(f32)                                                     # (D, 8H)
    bx = jnp.concatenate(
        [_reorder_gates(b_ih_f + b_hh_f), _reorder_gates(b_ih_b + b_hh_b)]
    ).reshape(1, 8 * H).astype(f32)                                   # (1, 8H)

    z = jnp.zeros((H, 4 * H), f32)
    wh = jnp.concatenate(
        [jnp.concatenate([_reorder_gates(w_hh_f.T), z], axis=1),
         jnp.concatenate([z, _reorder_gates(w_hh_b.T)], axis=1)],
        axis=0).astype(f32)                                           # (2H, 8H)

    aw = attn_w.reshape(1, 2 * H).astype(f32)
    ab = attn_b.reshape(1, 1).astype(f32)
    return {"wx": wx, "bx": bx, "wh": wh, "aw": aw, "ab": ab}


@jax.jit
def lstm_attention_forward(x, params):
    B, T, D = x.shape
    H = params["wh"].shape[0] // 2

    # Time-major flattening so timestep t occupies a contiguous row block.
    x_tm = jnp.transpose(x, (1, 0, 2)).reshape(T * B, D).astype(jnp.float32)

    out_shape = (
        jax.ShapeDtypeStruct((B, 2 * H), jnp.float32),       # context
        jax.ShapeDtypeStruct((B, T), jnp.float32),           # attn_weights
        jax.ShapeDtypeStruct((B, T * 2 * H), jnp.float32),   # lstm_out (lane-dense)
    )
    vmem = pltpu.MemorySpace.VMEM
    smem = pltpu.MemorySpace.SMEM

    # Tiny shapes: single full-array VMEM invocation, no grid, no scratch.
    ctx, attn, lo = pl.pallas_call(
        lstm_attn_kernel,
        out_shape=out_shape,
        in_specs=[
            pl.BlockSpec(memory_space=vmem),   # x_tm
            pl.BlockSpec(memory_space=vmem),   # wx
            pl.BlockSpec(memory_space=vmem),   # bx
            pl.BlockSpec(memory_space=vmem),   # wh (block-diagonal)
            pl.BlockSpec(memory_space=vmem),   # aw
            pl.BlockSpec(memory_space=smem),   # ab (scalar)
        ],
        out_specs=(
            pl.BlockSpec(memory_space=vmem),
            pl.BlockSpec(memory_space=vmem),
            pl.BlockSpec(memory_space=vmem),
        ),
    )(x_tm, params["wx"], params["bx"], params["wh"], params["aw"], params["ab"])

    # Row-major-identical reshape back to the module's (B, T, 2H) layout.
    return ctx, attn, lo.reshape(B, T, 2 * H)


# ----------------------------- pure-JAX reference -----------------------------
def reference_forward(x, w_ih_f, w_hh_f, b_ih_f, b_hh_f,
                      w_ih_b, w_hh_b, b_ih_b, b_hh_b, attn_w, attn_b):
    B, T, D = x.shape
    H = w_hh_f.shape[1]

    def make_step(wi, wh, b):
        def step(carry, x_t):
            h, c = carry
            g = x_t @ wi.T + h @ wh.T + b
            i = jax.nn.sigmoid(g[:, :H])
            f = jax.nn.sigmoid(g[:, H:2 * H])
            gg = jnp.tanh(g[:, 2 * H:3 * H])
            o = jax.nn.sigmoid(g[:, 3 * H:])
            c = f * c + i * gg
            h = o * jnp.tanh(c)
            return (h, c), h
        return step

    h0 = jnp.zeros((B, H), jnp.float32)
    c0 = jnp.zeros((B, H), jnp.float32)
    xs = jnp.transpose(x, (1, 0, 2))                     # (T, B, D)

    _, hs_f = lax.scan(make_step(w_ih_f, w_hh_f, b_ih_f + b_hh_f), (h0, c0), xs)
    _, hs_b = lax.scan(make_step(w_ih_b, w_hh_b, b_ih_b + b_hh_b), (h0, c0),
                       xs[::-1])
    hs_b = hs_b[::-1]
    lstm_out = jnp.concatenate([hs_f, hs_b], axis=-1)    # (T, B, 2H)
    lstm_out = jnp.transpose(lstm_out, (1, 0, 2))        # (B, T, 2H)

    scores = jnp.einsum("btd,d->bt", lstm_out, attn_w.reshape(-1)) + attn_b[0]
    attn = jax.nn.softmax(scores, axis=1)
    context = jnp.einsum("bt,btd->bd", attn, lstm_out)
    return context, attn, lstm_out


# ------------------------------------ main ------------------------------------
if __name__ == "__main__":
    B, T, D, H = 2, 8, 16, 32   # batch, seq, input_dim, hidden_dim

    key = jax.random.PRNGKey(0)
    keys = jax.random.split(key, 12)
    k = 1.0 / math.sqrt(H)

    def u(key, shape):
        return jax.random.uniform(key, shape, jnp.float32, -k, k)

    x = jax.random.normal(keys[0], (B, T, D), jnp.float32)

    # forward-direction LSTM params (PyTorch shapes)
    w_ih_f = u(keys[1], (4 * H, D))
    w_hh_f = u(keys[2], (4 * H, H))
    b_ih_f = u(keys[3], (4 * H,))
    b_hh_f = u(keys[4], (4 * H,))
    # backward-direction LSTM params
    w_ih_b = u(keys[5], (4 * H, D))
    w_hh_b = u(keys[6], (4 * H, H))
    b_ih_b = u(keys[7], (4 * H,))
    b_hh_b = u(keys[8], (4 * H,))
    # attention Linear(2H -> 1)
    attn_w = u(keys[9], (1, 2 * H))
    attn_b = u(keys[10], (1,))

    # One-time fused weight layouts.
    params = prepare_lstm_attention_params(
        w_ih_f, w_hh_f, b_ih_f, b_hh_f,
        w_ih_b, w_hh_b, b_ih_b, b_hh_b, attn_w, attn_b)

    context, attn_weights, lstm_out = jax.block_until_ready(
        lstm_attention_forward(x, params))

    ctx_ref, attn_ref_v, lstm_ref = reference_forward(
        x, w_ih_f, w_hh_f, b_ih_f, b_hh_f,
        w_ih_b, w_hh_b, b_ih_b, b_hh_b, attn_w, attn_b)

    assert jnp.allclose(lstm_out, lstm_ref, rtol=2e-3, atol=2e-3), "lstm_out mismatch"
    assert jnp.allclose(attn_weights, attn_ref_v, rtol=2e-3, atol=2e-3), "attn mismatch"
    assert jnp.allclose(context, ctx_ref, rtol=2e-3, atol=2e-3), "context mismatch"

    print("KERNEL_OK")
</pallas_src>

<mosaic_0001>
module attributes {stable_mosaic.version = 11 : i64} {
  func.func @lstm_attn_kernel(%arg0: memref<16x16xf32, #tpu.memory_space<vmem>>, %arg1: memref<16x256xf32, #tpu.memory_space<vmem>>, %arg2: memref<1x256xf32, #tpu.memory_space<vmem>>, %arg3: memref<64x256xf32, #tpu.memory_space<vmem>>, %arg4: memref<1x64xf32, #tpu.memory_space<vmem>>, %arg5: memref<1x1xf32, #tpu.memory_space<smem>>, %arg6: memref<2x64xf32, #tpu.memory_space<vmem>>, %arg7: memref<2x8xf32, #tpu.memory_space<vmem>>, %arg8: memref<2x512xf32, #tpu.memory_space<vmem>>) attributes {dimension_semantics = [], scalar_prefetch = 0 : i64, scratch_operands = 0 : i64, tpu.core_type = #tpu.core_type<tc>} {
    %c0 = arith.constant 0 : index
    %c0_0 = arith.constant 0 : index
    %0 = vector.load %arg0[%c0, %c0_0] : memref<16x16xf32, #tpu.memory_space<vmem>>, vector<16x16xf32>
    %c0_1 = arith.constant 0 : index
    %c0_2 = arith.constant 0 : index
    %1 = vector.load %arg1[%c0_1, %c0_2] : memref<16x256xf32, #tpu.memory_space<vmem>>, vector<16x256xf32>
    %cst = arith.constant dense<0.000000e+00> : vector<16x256xf32>
    %2 = tpu.matmul %0, %1, %cst {dimension_numbers = #tpu.dot_dimension_numbers<[1], [0], [0], [1], [0, 0, 1, 1], [], []>} : vector<16x16xf32>, vector<16x256xf32>, vector<16x256xf32> -> vector<16x256xf32>
    %c0_3 = arith.constant 0 : index
    %c0_4 = arith.constant 0 : index
    %3 = vector.load %arg2[%c0_3, %c0_4] : memref<1x256xf32, #tpu.memory_space<vmem>>, vector<1x256xf32>
    %4 = vector.broadcast %3 : vector<1x256xf32> to vector<16x256xf32>
    %5 = arith.addf %2, %4 : vector<16x256xf32>
    %c0_5 = arith.constant 0 : index
    %c0_6 = arith.constant 0 : index
    %6 = vector.load %arg3[%c0_5, %c0_6] : memref<64x256xf32, #tpu.memory_space<vmem>>, vector<64x256xf32>
    %cst_7 = arith.constant 0.000000e+00 : f32
    %7 = vector.broadcast %cst_7 : f32 to vector<2x32xf32>
    %8 = vector.extract_strided_slice %5 {offsets = [0, 0], sizes = [2, 128], strides = [1, 1]} : vector<16x256xf32> to vector<2x128xf32>
    %9 = vector.extract_strided_slice %5 {offsets = [14, 128], sizes = [2, 128], strides = [1, 1]} : vector<16x256xf32> to vector<2x128xf32>
    %10 = vector.extract_strided_slice %8 {offsets = [0, 0], sizes = [2, 96], strides = [1, 1]} : vector<2x128xf32> to vector<2x96xf32>
    %11 = arith.negf %10 : vector<2x96xf32>
    %12 = math.exp %11 : vector<2x96xf32>
    %cst_8 = arith.constant 1.000000e+00 : f32
    %13 = vector.broadcast %cst_8 : f32 to vector<2x96xf32>
    %14 = arith.addf %13, %12 : vector<2x96xf32>
    %15 = arith.divf %13, %14 : vector<2x96xf32>
    %16 = vector.extract_strided_slice %8 {offsets = [0, 96], sizes = [2, 32], strides = [1, 1]} : vector<2x128xf32> to vector<2x32xf32>
    %17 = math.tanh %16 : vector<2x32xf32>
    %18 = vector.extract_strided_slice %15 {offsets = [0, 0], sizes = [2, 32], strides = [1, 1]} : vector<2x96xf32> to vector<2x32xf32>
    %19 = vector.extract_strided_slice %15 {offsets = [0, 32], sizes = [2, 32], strides = [1, 1]} : vector<2x96xf32> to vector<2x32xf32>
    %20 = vector.extract_strided_slice %15 {offsets = [0, 64], sizes = [2, 32], strides = [1, 1]} : vector<2x96xf32> to vector<2x32xf32>
    %21 = arith.mulf %19, %7 : vector<2x32xf32>
    %22 = arith.mulf %18, %17 : vector<2x32xf32>
    %23 = arith.addf %21, %22 : vector<2x32xf32>
    %24 = math.tanh %23 : vector<2x32xf32>
    %25 = arith.mulf %20, %24 : vector<2x32xf32>
    %26 = vector.extract_strided_slice %9 {offsets = [0, 0], sizes = [2, 96], strides = [1, 1]} : vector<2x128xf32> to vector<2x96xf32>
    %27 = arith.negf %26 : vector<2x96xf32>
    %28 = math.exp %27 : vector<2x96xf32>
    %cst_9 = arith.constant 1.000000e+00 : f32
    %29 = vector.broadcast %cst_9 : f32 to vector<2x96xf32>
    %30 = arith.addf %29, %28 : vector<2x96xf32>
    %31 = arith.divf %29, %30 : vector<2x96xf32>
    %32 = vector.extract_strided_slice %9 {offsets = [0, 96], sizes = [2, 32], strides = [1, 1]} : vector<2x128xf32> to vector<2x32xf32>
    %33 = math.tanh %32 : vector<2x32xf32>
    %34 = vector.extract_strided_slice %31 {offsets = [0, 0], sizes = [2, 32], strides = [1, 1]} : vector<2x96xf32> to vector<2x32xf32>
    %35 = vector.extract_strided_slice %31 {offsets = [0, 32], sizes = [2, 32], strides = [1, 1]} : vector<2x96xf32> to vector<2x32xf32>
    %36 = vector.extract_strided_slice %31 {offsets = [0, 64], sizes = [2, 32], strides = [1, 1]} : vector<2x96xf32> to vector<2x32xf32>
    %37 = arith.mulf %35, %7 : vector<2x32xf32>
    %38 = arith.mulf %34, %33 : vector<2x32xf32>
    %39 = arith.addf %37, %38 : vector<2x32xf32>
    %40 = math.tanh %39 : vector<2x32xf32>
    %41 = arith.mulf %36, %40 : vector<2x32xf32>
    %42 = vector.extract_strided_slice %5 {offsets = [2, 0], sizes = [2, 128], strides = [1, 1]} : vector<16x256xf32> to vector<2x128xf32>
    %43 = vector.extract_strided_slice %5 {offsets = [12, 128], sizes = [2, 128], strides = [1, 1]} : vector<16x256xf32> to vector<2x128xf32>
    %44 = tpu.concatenate %25, %41 in 1 : vector<2x32xf32>, vector<2x32xf32> -> vector<2x64xf32>
    %cst_10 = arith.constant dense<0.000000e+00> : vector<2x256xf32>
    %45 = tpu.matmul %44, %6, %cst_10 {dimension_numbers = #tpu.dot_dimension_numbers<[1], [0], [0], [1], [0, 0, 1, 1], [], []>} : vector<2x64xf32>, vector<64x256xf32>, vector<2x256xf32> -> vector<2x256xf32>
    %46 = vector.extract_strided_slice %45 {offsets = [0, 0], sizes = [2, 128], strides = [1, 1]} : vector<2x256xf32> to vector<2x128xf32>
    %47 = arith.addf %42, %46 : vector<2x128xf32>
    %48 = vector.extract_strided_slice %45 {offsets = [0, 128], sizes = [2, 128], strides = [1, 1]} : vector<2x256xf32> to vector<2x128xf32>
    %49 = arith.addf %43, %48 : vector<2x128xf32>
    %50 = vector.extract_strided_slice %47 {offsets = [0, 0], sizes = [2, 96], strides = [1, 1]} : vector<2x128xf32> to vector<2x96xf32>
    %51 = arith.negf %50 : vector<2x96xf32>
    %52 = math.exp %51 : vector<2x96xf32>
    %cst_11 = arith.constant 1.000000e+00 : f32
    %53 = vector.broadcast %cst_11 : f32 to vector<2x96xf32>
    %54 = arith.addf %53, %52 : vector<2x96xf32>
    %55 = arith.divf %53, %54 : vector<2x96xf32>
    %56 = vector.extract_strided_slice %47 {offsets = [0, 96], sizes = [2, 32], strides = [1, 1]} : vector<2x128xf32> to vector<2x32xf32>
    %57 = math.tanh %56 : vector<2x32xf32>
    %58 = vector.extract_strided_slice %55 {offsets = [0, 0], sizes = [2, 32], strides = [1, 1]} : vector<2x96xf32> to vector<2x32xf32>
    %59 = vector.extract_strided_slice %55 {offsets = [0, 32], sizes = [2, 32], strides = [1, 1]} : vector<2x96xf32> to vector<2x32xf32>
    %60 = vector.extract_strided_slice %55 {offsets = [0, 64], sizes = [2, 32], strides = [1, 1]} : vector<2x96xf32> to vector<2x32xf32>
    %61 = arith.mulf %59, %23 : vector<2x32xf32>
    %62 = arith.mulf %58, %57 : vector<2x32xf32>
    %63 = arith.addf %61, %62 : vector<2x32xf32>
    %64 = math.tanh %63 : vector<2x32xf32>
    %65 = arith.mulf %60, %64 : vector<2x32xf32>
    %66 = vector.extract_strided_slice %49 {offsets = [0, 0], sizes = [2, 96], strides = [1, 1]} : vector<2x128xf32> to vector<2x96xf32>
    %67 = arith.negf %66 : vector<2x96xf32>
    %68 = math.exp %67 : vector<2x96xf32>
    %cst_12 = arith.constant 1.000000e+00 : f32
    %69 = vector.broadcast %cst_12 : f32 to vector<2x96xf32>
    %70 = arith.addf %69, %68 : vector<2x96xf32>
    %71 = arith.divf %69, %70 : vector<2x96xf32>
    %72 = vector.extract_strided_slice %49 {offsets = [0, 96], sizes = [2, 32], strides = [1, 1]} : vector<2x128xf32> to vector<2x32xf32>
    %73 = math.tanh %72 : vector<2x32xf32>
    %74 = vector.extract_strided_slice %71 {offsets = [0, 0], sizes = [2, 32], strides = [1, 1]} : vector<2x96xf32> to vector<2x32xf32>
    %75 = vector.extract_strided_slice %71 {offsets = [0, 32], sizes = [2, 32], strides = [1, 1]} : vector<2x96xf32> to vector<2x32xf32>
    %76 = vector.extract_strided_slice %71 {offsets = [0, 64], sizes = [2, 32], strides = [1, 1]} : vector<2x96xf32> to vector<2x32xf32>
    %77 = arith.mulf %75, %39 : vector<2x32xf32>
    %78 = arith.mulf %74, %73 : vector<2x32xf32>
    %79 = arith.addf %77, %78 : vector<2x32xf32>
    %80 = math.tanh %79 : vector<2x32xf32>
    %81 = arith.mulf %76, %80 : vector<2x32xf32>
    %82 = vector.extract_strided_slice %5 {offsets = [4, 0], sizes = [2, 128], strides = [1, 1]} : vector<16x256xf32> to vector<2x128xf32>
    %83 = vector.extract_strided_slice %5 {offsets = [10, 128], sizes = [2, 128], strides = [1, 1]} : vector<16x256xf32> to vector<2x128xf32>
    %84 = tpu.concatenate %65, %81 in 1 : vector<2x32xf32>, vector<2x32xf32> -> vector<2x64xf32>
    %cst_13 = arith.constant dense<0.000000e+00> : vector<2x256xf32>
    %85 = tpu.matmul %84, %6, %cst_13 {dimension_numbers = #tpu.dot_dimension_numbers<[1], [0], [0], [1], [0, 0, 1, 1], [], []>} : vector<2x64xf32>, vector<64x256xf32>, vector<2x256xf32> -> vector<2x256xf32>
    %86 = vector.extract_strided_slice %85 {offsets = [0, 0], sizes = [2, 128], strides = [1, 1]} : vector<2x256xf32> to vector<2x128xf32>
    %87 = arith.addf %82, %86 : vector<2x128xf32>
    %88 = vector.extract_strided_slice %85 {offsets = [0, 128], sizes = [2, 128], strides = [1, 1]} : vector<2x256xf32> to vector<2x128xf32>
    %89 = arith.addf %83, %88 : vector<2x128xf32>
    %90 = vector.extract_strided_slice %87 {offsets = [0, 0], sizes = [2, 96], strides = [1, 1]} : vector<2x128xf32> to vector<2x96xf32>
    %91 = arith.negf %90 : vector<2x96xf32>
    %92 = math.exp %91 : vector<2x96xf32>
    %cst_14 = arith.constant 1.000000e+00 : f32
    %93 = vector.broadcast %cst_14 : f32 to vector<2x96xf32>
    %94 = arith.addf %93, %92 : vector<2x96xf32>
    %95 = arith.divf %93, %94 : vector<2x96xf32>
    %96 = vector.extract_strided_slice %87 {offsets = [0, 96], sizes = [2, 32], strides = [1, 1]} : vector<2x128xf32> to vector<2x32xf32>
    %97 = math.tanh %96 : vector<2x32xf32>
    %98 = vector.extract_strided_slice %95 {offsets = [0, 0], sizes = [2, 32], strides = [1, 1]} : vector<2x96xf32> to vector<2x32xf32>
    %99 = vector.extract_strided_slice %95 {offsets = [0, 32], sizes = [2, 32], strides = [1, 1]} : vector<2x96xf32> to vector<2x32xf32>
    %100 = vector.extract_strided_slice %95 {offsets = [0, 64], sizes = [2, 32], strides = [1, 1]} : vector<2x96xf32> to vector<2x32xf32>
    %101 = arith.mulf %99, %63 : vector<2x32xf32>
    %102 = arith.mulf %98, %97 : vector<2x32xf32>
    %103 = arith.addf %101, %102 : vector<2x32xf32>
    %104 = math.tanh %103 : vector<2x32xf32>
    %105 = arith.mulf %100, %104 : vector<2x32xf32>
    %106 = vector.extract_strided_slice %89 {offsets = [0, 0], sizes = [2, 96], strides = [1, 1]} : vector<2x128xf32> to vector<2x96xf32>
    %107 = arith.negf %106 : vector<2x96xf32>
    %108 = math.exp %107 : vector<2x96xf32>
    %cst_15 = arith.constant 1.000000e+00 : f32
    %109 = vector.broadcast %cst_15 : f32 to vector<2x96xf32>
    %110 = arith.addf %109, %108 : vector<2x96xf32>
    %111 = arith.divf %109, %110 : vector<2x96xf32>
    %112 = vector.extract_strided_slice %89 {offsets = [0, 96], sizes = [2, 32], strides = [1, 1]} : vector<2x128xf32> to vector<2x32xf32>
    %113 = math.tanh %112 : vector<2x32xf32>
    %114 = vector.extract_strided_slice %111 {offsets = [0, 0], sizes = [2, 32], strides = [1, 1]} : vector<2x96xf32> to vector<2x32xf32>
    %115 = vector.extract_strided_slice %111 {offsets = [0, 32], sizes = [2, 32], strides = [1, 1]} : vector<2x96xf32> to vector<2x32xf32>
    %116 = vector.extract_strided_slice %111 {offsets = [0, 64], sizes = [2, 32], strides = [1, 1]} : vector<2x96xf32> to vector<2x32xf32>
    %117 = arith.mulf %115, %79 : vector<2x32xf32>
    %118 = arith.mulf %114, %113 : vector<2x32xf32>
    %119 = arith.addf %117, %118 : vector<2x32xf32>
    %120 = math.tanh %119 : vector<2x32xf32>
    %121 = arith.mulf %116, %120 : vector<2x32xf32>
    %122 = vector.extract_strided_slice %5 {offsets = [6, 0], sizes = [2, 128], strides = [1, 1]} : vector<16x256xf32> to vector<2x128xf32>
    %123 = vector.extract_strided_slice %5 {offsets = [8, 128], sizes = [2, 128], strides = [1, 1]} : vector<16x256xf32> to vector<2x128xf32>
    %124 = tpu.concatenate %105, %121 in 1 : vector<2x32xf32>, vector<2x32xf32> -> vector<2x64xf32>
    %cst_16 = arith.constant dense<0.000000e+00> : vector<2x256xf32>
    %125 = tpu.matmul %124, %6, %cst_16 {dimension_numbers = #tpu.dot_dimension_numbers<[1], [0], [0], [1], [0, 0, 1, 1], [], []>} : vector<2x64xf32>, vector<64x256xf32>, vector<2x256xf32> -> vector<2x256xf32>
    %126 = vector.extract_strided_slice %125 {offsets = [0, 0], sizes = [2, 128], strides = [1, 1]} : vector<2x256xf32> to vector<2x128xf32>
    %127 = arith.addf %122, %126 : vector<2x128xf32>
    %128 = vector.extract_strided_slice %125 {offsets = [0, 128], sizes = [2, 128], strides = [1, 1]} : vector<2x256xf32> to vector<2x128xf32>
    %129 = arith.addf %123, %128 : vector<2x128xf32>
    %130 = vector.extract_strided_slice %127 {offsets = [0, 0], sizes = [2, 96], strides = [1, 1]} : vector<2x128xf32> to vector<2x96xf32>
    %131 = arith.negf %130 : vector<2x96xf32>
    %132 = math.exp %131 : vector<2x96xf32>
    %cst_17 = arith.constant 1.000000e+00 : f32
    %133 = vector.broadcast %cst_17 : f32 to vector<2x96xf32>
    %134 = arith.addf %133, %132 : vector<2x96xf32>
    %135 = arith.divf %133, %134 : vector<2x96xf32>
    %136 = vector.extract_strided_slice %127 {offsets = [0, 96], sizes = [2, 32], strides = [1, 1]} : vector<2x128xf32> to vector<2x32xf32>
    %137 = math.tanh %136 : vector<2x32xf32>
    %138 = vector.extract_strided_slice %135 {offsets = [0, 0], sizes = [2, 32], strides = [1, 1]} : vector<2x96xf32> to vector<2x32xf32>
    %139 = vector.extract_strided_slice %135 {offsets = [0, 32], sizes = [2, 32], strides = [1, 1]} : vector<2x96xf32> to vector<2x32xf32>
    %140 = vector.extract_strided_slice %135 {offsets = [0, 64], sizes = [2, 32], strides = [1, 1]} : vector<2x96xf32> to vector<2x32xf32>
    %141 = arith.mulf %139, %103 : vector<2x32xf32>
    %142 = arith.mulf %138, %137 : vector<2x32xf32>
    %143 = arith.addf %141, %142 : vector<2x32xf32>
    %144 = math.tanh %143 : vector<2x32xf32>
    %145 = arith.mulf %140, %144 : vector<2x32xf32>
    %146 = vector.extract_strided_slice %129 {offsets = [0, 0], sizes = [2, 96], strides = [1, 1]} : vector<2x128xf32> to vector<2x96xf32>
    %147 = arith.negf %146 : vector<2x96xf32>
    %148 = math.exp %147 : vector<2x96xf32>
    %cst_18 = arith.constant 1.000000e+00 : f32
    %149 = vector.broadcast %cst_18 : f32 to vector<2x96xf32>
    %150 = arith.addf %149, %148 : vector<2x96xf32>
    %151 = arith.divf %149, %150 : vector<2x96xf32>
    %152 = vector.extract_strided_slice %129 {offsets = [0, 96], sizes = [2, 32], strides = [1, 1]} : vector<2x128xf32> to vector<2x32xf32>
    %153 = math.tanh %152 : vector<2x32xf32>
    %154 = vector.extract_strided_slice %151 {offsets = [0, 0], sizes = [2, 32], strides = [1, 1]} : vector<2x96xf32> to vector<2x32xf32>
    %155 = vector.extract_strided_slice %151 {offsets = [0, 32], sizes = [2, 32], strides = [1, 1]} : vector<2x96xf32> to vector<2x32xf32>
    %156 = vector.extract_strided_slice %151 {offsets = [0, 64], sizes = [2, 32], strides = [1, 1]} : vector<2x96xf32> to vector<2x32xf32>
    %157 = arith.mulf %155, %119 : vector<2x32xf32>
    %158 = arith.mulf %154, %153 : vector<2x32xf32>
    %159 = arith.addf %157, %158 : vector<2x32xf32>
    %160 = math.tanh %159 : vector<2x32xf32>
    %161 = arith.mulf %156, %160 : vector<2x32xf32>
    %162 = vector.extract_strided_slice %5 {offsets = [8, 0], sizes = [2, 128], strides = [1, 1]} : vector<16x256xf32> to vector<2x128xf32>
    %163 = vector.extract_strided_slice %5 {offsets = [6, 128], sizes = [2, 128], strides = [1, 1]} : vector<16x256xf32> to vector<2x128xf32>
    %164 = tpu.concatenate %145, %161 in 1 : vector<2x32xf32>, vector<2x32xf32> -> vector<2x64xf32>
    %cst_19 = arith.constant dense<0.000000e+00> : vector<2x256xf32>
    %165 = tpu.matmul %164, %6, %cst_19 {dimension_numbers = #tpu.dot_dimension_numbers<[1], [0], [0], [1], [0, 0, 1, 1], [], []>} : vector<2x64xf32>, vector<64x256xf32>, vector<2x256xf32> -> vector<2x256xf32>
    %166 = vector.extract_strided_slice %165 {offsets = [0, 0], sizes = [2, 128], strides = [1, 1]} : vector<2x256xf32> to vector<2x128xf32>
    %167 = arith.addf %162, %166 : vector<2x128xf32>
    %168 = vector.extract_strided_slice %165 {offsets = [0, 128], sizes = [2, 128], strides = [1, 1]} : vector<2x256xf32> to vector<2x128xf32>
    %169 = arith.addf %163, %168 : vector<2x128xf32>
    %170 = vector.extract_strided_slice %167 {offsets = [0, 0], sizes = [2, 96], strides = [1, 1]} : vector<2x128xf32> to vector<2x96xf32>
    %171 = arith.negf %170 : vector<2x96xf32>
    %172 = math.exp %171 : vector<2x96xf32>
    %cst_20 = arith.constant 1.000000e+00 : f32
    %173 = vector.broadcast %cst_20 : f32 to vector<2x96xf32>
    %174 = arith.addf %173, %172 : vector<2x96xf32>
    %175 = arith.divf %173, %174 : vector<2x96xf32>
    %176 = vector.extract_strided_slice %167 {offsets = [0, 96], sizes = [2, 32], strides = [1, 1]} : vector<2x128xf32> to vector<2x32xf32>
    %177 = math.tanh %176 : vector<2x32xf32>
    %178 = vector.extract_strided_slice %175 {offsets = [0, 0], sizes = [2, 32], strides = [1, 1]} : vector<2x96xf32> to vector<2x32xf32>
    %179 = vector.extract_strided_slice %175 {offsets = [0, 32], sizes = [2, 32], strides = [1, 1]} : vector<2x96xf32> to vector<2x32xf32>
    %180 = vector.extract_strided_slice %175 {offsets = [0, 64], sizes = [2, 32], strides = [1, 1]} : vector<2x96xf32> to vector<2x32xf32>
    %181 = arith.mulf %179, %143 : vector<2x32xf32>
    %182 = arith.mulf %178, %177 : vector<2x32xf32>
    %183 = arith.addf %181, %182 : vector<2x32xf32>
    %184 = math.tanh %183 : vector<2x32xf32>
    %185 = arith.mulf %180, %184 : vector<2x32xf32>
    %186 = vector.extract_strided_slice %169 {offsets = [0, 0], sizes = [2, 96], strides = [1, 1]} : vector<2x128xf32> to vector<2x96xf32>
    %187 = arith.negf %186 : vector<2x96xf32>
    %188 = math.exp %187 : vector<2x96xf32>
    %cst_21 = arith.constant 1.000000e+00 : f32
    %189 = vector.broadcast %cst_21 : f32 to vector<2x96xf32>
    %190 = arith.addf %189, %188 : vector<2x96xf32>
    %191 = arith.divf %189, %190 : vector<2x96xf32>
    %192 = vector.extract_strided_slice %169 {offsets = [0, 96], sizes = [2, 32], strides = [1, 1]} : vector<2x128xf32> to vector<2x32xf32>
    %193 = math.tanh %192 : vector<2x32xf32>
    %194 = vector.extract_strided_slice %191 {offsets = [0, 0], sizes = [2, 32], strides = [1, 1]} : vector<2x96xf32> to vector<2x32xf32>
    %195 = vector.extract_strided_slice %191 {offsets = [0, 32], sizes = [2, 32], strides = [1, 1]} : vector<2x96xf32> to vector<2x32xf32>
    %196 = vector.extract_strided_slice %191 {offsets = [0, 64], sizes = [2, 32], strides = [1, 1]} : vector<2x96xf32> to vector<2x32xf32>
    %197 = arith.mulf %195, %159 : vector<2x32xf32>
    %198 = arith.mulf %194, %193 : vector<2x32xf32>
    %199 = arith.addf %197, %198 : vector<2x32xf32>
    %200 = math.tanh %199 : vector<2x32xf32>
    %201 = arith.mulf %196, %200 : vector<2x32xf32>
    %202 = vector.extract_strided_slice %5 {offsets = [10, 0], sizes = [2, 128], strides = [1, 1]} : vector<16x256xf32> to vector<2x128xf32>
    %203 = vector.extract_strided_slice %5 {offsets = [4, 128], sizes = [2, 128], strides = [1, 1]} : vector<16x256xf32> to vector<2x128xf32>
    %204 = tpu.concatenate %185, %201 in 1 : vector<2x32xf32>, vector<2x32xf32> -> vector<2x64xf32>
    %cst_22 = arith.constant dense<0.000000e+00> : vector<2x256xf32>
    %205 = tpu.matmul %204, %6, %cst_22 {dimension_numbers = #tpu.dot_dimension_numbers<[1], [0], [0], [1], [0, 0, 1, 1], [], []>} : vector<2x64xf32>, vector<64x256xf32>, vector<2x256xf32> -> vector<2x256xf32>
    %206 = vector.extract_strided_slice %205 {offsets = [0, 0], sizes = [2, 128], strides = [1, 1]} : vector<2x256xf32> to vector<2x128xf32>
    %207 = arith.addf %202, %206 : vector<2x128xf32>
    %208 = vector.extract_strided_slice %205 {offsets = [0, 128], sizes = [2, 128], strides = [1, 1]} : vector<2x256xf32> to vector<2x128xf32>
    %209 = arith.addf %203, %208 : vector<2x128xf32>
    %210 = vector.extract_strided_slice %207 {offsets = [0, 0], sizes = [2, 96], strides = [1, 1]} : vector<2x128xf32> to vector<2x96xf32>
    %211 = arith.negf %210 : vector<2x96xf32>
    %212 = math.exp %211 : vector<2x96xf32>
    %cst_23 = arith.constant 1.000000e+00 : f32
    %213 = vector.broadcast %cst_23 : f32 to vector<2x96xf32>
    %214 = arith.addf %213, %212 : vector<2x96xf32>
    %215 = arith.divf %213, %214 : vector<2x96xf32>
    %216 = vector.extract_strided_slice %207 {offsets = [0, 96], sizes = [2, 32], strides = [1, 1]} : vector<2x128xf32> to vector<2x32xf32>
    %217 = math.tanh %216 : vector<2x32xf32>
    %218 = vector.extract_strided_slice %215 {offsets = [0, 0], sizes = [2, 32], strides = [1, 1]} : vector<2x96xf32> to vector<2x32xf32>
    %219 = vector.extract_strided_slice %215 {offsets = [0, 32], sizes = [2, 32], strides = [1, 1]} : vector<2x96xf32> to vector<2x32xf32>
    %220 = vector.extract_strided_slice %215 {offsets = [0, 64], sizes = [2, 32], strides = [1, 1]} : vector<2x96xf32> to vector<2x32xf32>
    %221 = arith.mulf %219, %183 : vector<2x32xf32>
    %222 = arith.mulf %218, %217 : vector<2x32xf32>
    %223 = arith.addf %221, %222 : vector<2x32xf32>
    %224 = math.tanh %223 : vector<2x32xf32>
    %225 = arith.mulf %220, %224 : vector<2x32xf32>
    %226 = vector.extract_strided_slice %209 {offsets = [0, 0], sizes = [2, 96], strides = [1, 1]} : vector<2x128xf32> to vector<2x96xf32>
    %227 = arith.negf %226 : vector<2x96xf32>
    %228 = math.exp %227 : vector<2x96xf32>
    %cst_24 = arith.constant 1.000000e+00 : f32
    %229 = vector.broadcast %cst_24 : f32 to vector<2x96xf32>
    %230 = arith.addf %229, %228 : vector<2x96xf32>
    %231 = arith.divf %229, %230 : vector<2x96xf32>
    %232 = vector.extract_strided_slice %209 {offsets = [0, 96], sizes = [2, 32], strides = [1, 1]} : vector<2x128xf32> to vector<2x32xf32>
    %233 = math.tanh %232 : vector<2x32xf32>
    %234 = vector.extract_strided_slice %231 {offsets = [0, 0], sizes = [2, 32], strides = [1, 1]} : vector<2x96xf32> to vector<2x32xf32>
    %235 = vector.extract_strided_slice %231 {offsets = [0, 32], sizes = [2, 32], strides = [1, 1]} : vector<2x96xf32> to vector<2x32xf32>
    %236 = vector.extract_strided_slice %231 {offsets = [0, 64], sizes = [2, 32], strides = [1, 1]} : vector<2x96xf32> to vector<2x32xf32>
    %237 = arith.mulf %235, %199 : vector<2x32xf32>
    %238 = arith.mulf %234, %233 : vector<2x32xf32>
    %239 = arith.addf %237, %238 : vector<2x32xf32>
    %240 = math.tanh %239 : vector<2x32xf32>
    %241 = arith.mulf %236, %240 : vector<2x32xf32>
    %242 = vector.extract_strided_slice %5 {offsets = [12, 0], sizes = [2, 128], strides = [1, 1]} : vector<16x256xf32> to vector<2x128xf32>
    %243 = vector.extract_strided_slice %5 {offsets = [2, 128], sizes = [2, 128], strides = [1, 1]} : vector<16x256xf32> to vector<2x128xf32>
    %244 = tpu.concatenate %225, %241 in 1 : vector<2x32xf32>, vector<2x32xf32> -> vector<2x64xf32>
    %cst_25 = arith.constant dense<0.000000e+00> : vector<2x256xf32>
    %245 = tpu.matmul %244, %6, %cst_25 {dimension_numbers = #tpu.dot_dimension_numbers<[1], [0], [0], [1], [0, 0, 1, 1], [], []>} : vector<2x64xf32>, vector<64x256xf32>, vector<2x256xf32> -> vector<2x256xf32>
    %246 = vector.extract_strided_slice %245 {offsets = [0, 0], sizes = [2, 128], strides = [1, 1]} : vector<2x256xf32> to vector<2x128xf32>
    %247 = arith.addf %242, %246 : vector<2x128xf32>
    %248 = vector.extract_strided_slice %245 {offsets = [0, 128], sizes = [2, 128], strides = [1, 1]} : vector<2x256xf32> to vector<2x128xf32>
    %249 = arith.addf %243, %248 : vector<2x128xf32>
    %250 = vector.extract_strided_slice %247 {offsets = [0, 0], sizes = [2, 96], strides = [1, 1]} : vector<2x128xf32> to vector<2x96xf32>
    %251 = arith.negf %250 : vector<2x96xf32>
    %252 = math.exp %251 : vector<2x96xf32>
    %cst_26 = arith.constant 1.000000e+00 : f32
    %253 = vector.broadcast %cst_26 : f32 to vector<2x96xf32>
    %254 = arith.addf %253, %252 : vector<2x96xf32>
    %255 = arith.divf %253, %254 : vector<2x96xf32>
    %256 = vector.extract_strided_slice %247 {offsets = [0, 96], sizes = [2, 32], strides = [1, 1]} : vector<2x128xf32> to vector<2x32xf32>
    %257 = math.tanh %256 : vector<2x32xf32>
    %258 = vector.extract_strided_slice %255 {offsets = [0, 0], sizes = [2, 32], strides = [1, 1]} : vector<2x96xf32> to vector<2x32xf32>
    %259 = vector.extract_strided_slice %255 {offsets = [0, 32], sizes = [2, 32], strides = [1, 1]} : vector<2x96xf32> to vector<2x32xf32>
    %260 = vector.extract_strided_slice %255 {offsets = [0, 64], sizes = [2, 32], strides = [1, 1]} : vector<2x96xf32> to vector<2x32xf32>
    %261 = arith.mulf %259, %223 : vector<2x32xf32>
    %262 = arith.mulf %258, %257 : vector<2x32xf32>
    %263 = arith.addf %261, %262 : vector<2x32xf32>
    %264 = math.tanh %263 : vector<2x32xf32>
    %265 = arith.mulf %260, %264 : vector<2x32xf32>
    %266 = vector.extract_strided_slice %249 {offsets = [0, 0], sizes = [2, 96], strides = [1, 1]} : vector<2x128xf32> to vector<2x96xf32>
    %267 = arith.negf %266 : vector<2x96xf32>
    %268 = math.exp %267 : vector<2x96xf32>
    %cst_27 = arith.constant 1.000000e+00 : f32
    %269 = vector.broadcast %cst_27 : f32 to vector<2x96xf32>
    %270 = arith.addf %269, %268 : vector<2x96xf32>
    %271 = arith.divf %269, %270 : vector<2x96xf32>
    %272 = vector.extract_strided_slice %249 {offsets = [0, 96], sizes = [2, 32], strides = [1, 1]} : vector<2x128xf32> to vector<2x32xf32>
    %273 = math.tanh %272 : vector<2x32xf32>
    %274 = vector.extract_strided_slice %271 {offsets = [0, 0], sizes = [2, 32], strides = [1, 1]} : vector<2x96xf32> to vector<2x32xf32>
    %275 = vector.extract_strided_slice %271 {offsets = [0, 32], sizes = [2, 32], strides = [1, 1]} : vector<2x96xf32> to vector<2x32xf32>
    %276 = vector.extract_strided_slice %271 {offsets = [0, 64], sizes = [2, 32], strides = [1, 1]} : vector<2x96xf32> to vector<2x32xf32>
    %277 = arith.mulf %275, %239 : vector<2x32xf32>
    %278 = arith.mulf %274, %273 : vector<2x32xf32>
    %279 = arith.addf %277, %278 : vector<2x32xf32>
    %280 = math.tanh %279 : vector<2x32xf32>
    %281 = arith.mulf %276, %280 : vector<2x32xf32>
    %282 = vector.extract_strided_slice %5 {offsets = [14, 0], sizes = [2, 128], strides = [1, 1]} : vector<16x256xf32> to vector<2x128xf32>
    %283 = vector.extract_strided_slice %5 {offsets = [0, 128], sizes = [2, 128], strides = [1, 1]} : vector<16x256xf32> to vector<2x128xf32>
    %284 = tpu.concatenate %265, %281 in 1 : vector<2x32xf32>, vector<2x32xf32> -> vector<2x64xf32>
    %cst_28 = arith.constant dense<0.000000e+00> : vector<2x256xf32>
    %285 = tpu.matmul %284, %6, %cst_28 {dimension_numbers = #tpu.dot_dimension_numbers<[1], [0], [0], [1], [0, 0, 1, 1], [], []>} : vector<2x64xf32>, vector<64x256xf32>, vector<2x256xf32> -> vector<2x256xf32>
    %286 = vector.extract_strided_slice %285 {offsets = [0, 0], sizes = [2, 128], strides = [1, 1]} : vector<2x256xf32> to vector<2x128xf32>
    %287 = arith.addf %282, %286 : vector<2x128xf32>
    %288 = vector.extract_strided_slice %285 {offsets = [0, 128], sizes = [2, 128], strides = [1, 1]} : vector<2x256xf32> to vector<2x128xf32>
    %289 = arith.addf %283, %288 : vector<2x128xf32>
    %290 = vector.extract_strided_slice %287 {offsets = [0, 0], sizes = [2, 96], strides = [1, 1]} : vector<2x128xf32> to vector<2x96xf32>
    %291 = arith.negf %290 : vector<2x96xf32>
    %292 = math.exp %291 : vector<2x96xf32>
    %cst_29 = arith.constant 1.000000e+00 : f32
    %293 = vector.broadcast %cst_29 : f32 to vector<2x96xf32>
    %294 = arith.addf %293, %292 : vector<2x96xf32>
    %295 = arith.divf %293, %294 : vector<2x96xf32>
    %296 = vector.extract_strided_slice %287 {offsets = [0, 96], sizes = [2, 32], strides = [1, 1]} : vector<2x128xf32> to vector<2x32xf32>
    %297 = math.tanh %296 : vector<2x32xf32>
    %298 = vector.extract_strided_slice %295 {offsets = [0, 0], sizes = [2, 32], strides = [1, 1]} : vector<2x96xf32> to vector<2x32xf32>
    %299 = vector.extract_strided_slice %295 {offsets = [0, 32], sizes = [2, 32], strides = [1, 1]} : vector<2x96xf32> to vector<2x32xf32>
    %300 = vector.extract_strided_slice %295 {offsets = [0, 64], sizes = [2, 32], strides = [1, 1]} : vector<2x96xf32> to vector<2x32xf32>
    %301 = arith.mulf %299, %263 : vector<2x32xf32>
    %302 = arith.mulf %298, %297 : vector<2x32xf32>
    %303 = arith.addf %301, %302 : vector<2x32xf32>
    %304 = math.tanh %303 : vector<2x32xf32>
    %305 = arith.mulf %300, %304 : vector<2x32xf32>
    %306 = vector.extract_strided_slice %289 {offsets = [0, 0], sizes = [2, 96], strides = [1, 1]} : vector<2x128xf32> to vector<2x96xf32>
    %307 = arith.negf %306 : vector<2x96xf32>
    %308 = math.exp %307 : vector<2x96xf32>
    %cst_30 = arith.constant 1.000000e+00 : f32
    %309 = vector.broadcast %cst_30 : f32 to vector<2x96xf32>
    %310 = arith.addf %309, %308 : vector<2x96xf32>
    %311 = arith.divf %309, %310 : vector<2x96xf32>
    %312 = vector.extract_strided_slice %289 {offsets = [0, 96], sizes = [2, 32], strides = [1, 1]} : vector<2x128xf32> to vector<2x32xf32>
    %313 = math.tanh %312 : vector<2x32xf32>
    %314 = vector.extract_strided_slice %311 {offsets = [0, 0], sizes = [2, 32], strides = [1, 1]} : vector<2x96xf32> to vector<2x32xf32>
    %315 = vector.extract_strided_slice %311 {offsets = [0, 32], sizes = [2, 32], strides = [1, 1]} : vector<2x96xf32> to vector<2x32xf32>
    %316 = vector.extract_strided_slice %311 {offsets = [0, 64], sizes = [2, 32], strides = [1, 1]} : vector<2x96xf32> to vector<2x32xf32>
    %317 = arith.mulf %315, %279 : vector<2x32xf32>
    %318 = arith.mulf %314, %313 : vector<2x32xf32>
    %319 = arith.addf %317, %318 : vector<2x32xf32>
    %320 = math.tanh %319 : vector<2x32xf32>
    %321 = arith.mulf %316, %320 : vector<2x32xf32>
    %c0_31 = arith.constant 0 : index
    %c0_32 = arith.constant 0 : index
    %322 = vector.load %arg4[%c0_31, %c0_32] : memref<1x64xf32, #tpu.memory_space<vmem>>, vector<1x64xf32>
    %c0_33 = arith.constant 0 : index
    %c0_34 = arith.constant 0 : index
    %323 = memref.load %arg5[%c0_33, %c0_34] : memref<1x1xf32, #tpu.memory_space<smem>>
    %324 = tpu.concatenate %25, %321 in 1 : vector<2x32xf32>, vector<2x32xf32> -> vector<2x64xf32>
    %325 = vector.broadcast %322 : vector<1x64xf32> to vector<2x64xf32>
    %326 = arith.mulf %324, %325 : vector<2x64xf32>
    %cst_35 = arith.constant dense<0.000000e+00> : vector<2xf32>
    %327 = vector.multi_reduction <add>, %326, %cst_35 [1] : vector<2x64xf32> to vector<2xf32>
    %328 = vector.shape_cast %327 : vector<2xf32> to vector<2x1xf32>
    %329 = tpu.concatenate %65, %281 in 1 : vector<2x32xf32>, vector<2x32xf32> -> vector<2x64xf32>
    %330 = vector.broadcast %322 : vector<1x64xf32> to vector<2x64xf32>
    %331 = arith.mulf %329, %330 : vector<2x64xf32>
    %cst_36 = arith.constant dense<0.000000e+00> : vector<2xf32>
    %332 = vector.multi_reduction <add>, %331, %cst_36 [1] : vector<2x64xf32> to vector<2xf32>
    %333 = vector.shape_cast %332 : vector<2xf32> to vector<2x1xf32>
    %334 = tpu.concatenate %105, %241 in 1 : vector<2x32xf32>, vector<2x32xf32> -> vector<2x64xf32>
    %335 = vector.broadcast %322 : vector<1x64xf32> to vector<2x64xf32>
    %336 = arith.mulf %334, %335 : vector<2x64xf32>
    %cst_37 = arith.constant dense<0.000000e+00> : vector<2xf32>
    %337 = vector.multi_reduction <add>, %336, %cst_37 [1] : vector<2x64xf32> to vector<2xf32>
    %338 = vector.shape_cast %337 : vector<2xf32> to vector<2x1xf32>
    %339 = tpu.concatenate %145, %201 in 1 : vector<2x32xf32>, vector<2x32xf32> -> vector<2x64xf32>
    %340 = vector.broadcast %322 : vector<1x64xf32> to vector<2x64xf32>
    %341 = arith.mulf %339, %340 : vector<2x64xf32>
    %cst_38 = arith.constant dense<0.000000e+00> : vector<2xf32>
    %342 = vector.multi_reduction <add>, %341, %cst_38 [1] : vector<2x64xf32> to vector<2xf32>
    %343 = vector.shape_cast %342 : vector<2xf32> to vector<2x1xf32>
    %344 = tpu.concatenate %185, %161 in 1 : vector<2x32xf32>, vector<2x32xf32> -> vector<2x64xf32>
    %345 = vector.broadcast %322 : vector<1x64xf32> to vector<2x64xf32>
    %346 = arith.mulf %344, %345 : vector<2x64xf32>
    %cst_39 = arith.constant dense<0.000000e+00> : vector<2xf32>
    %347 = vector.multi_reduction <add>, %346, %cst_39 [1] : vector<2x64xf32> to vector<2xf32>
    %348 = vector.shape_cast %347 : vector<2xf32> to vector<2x1xf32>
    %349 = tpu.concatenate %225, %121 in 1 : vector<2x32xf32>, vector<2x32xf32> -> vector<2x64xf32>
    %350 = vector.broadcast %322 : vector<1x64xf32> to vector<2x64xf32>
    %351 = arith.mulf %349, %350 : vector<2x64xf32>
    %cst_40 = arith.constant dense<0.000000e+00> : vector<2xf32>
    %352 = vector.multi_reduction <add>, %351, %cst_40 [1] : vector<2x64xf32> to vector<2xf32>
    %353 = vector.shape_cast %352 : vector<2xf32> to vector<2x1xf32>
    %354 = tpu.concatenate %265, %81 in 1 : vector<2x32xf32>, vector<2x32xf32> -> vector<2x64xf32>
    %355 = vector.broadcast %322 : vector<1x64xf32> to vector<2x64xf32>
    %356 = arith.mulf %354, %355 : vector<2x64xf32>
    %cst_41 = arith.constant dense<0.000000e+00> : vector<2xf32>
    %357 = vector.multi_reduction <add>, %356, %cst_41 [1] : vector<2x64xf32> to vector<2xf32>
    %358 = vector.shape_cast %357 : vector<2xf32> to vector<2x1xf32>
    %359 = tpu.concatenate %305, %41 in 1 : vector<2x32xf32>, vector<2x32xf32> -> vector<2x64xf32>
    %360 = vector.broadcast %322 : vector<1x64xf32> to vector<2x64xf32>
    %361 = arith.mulf %359, %360 : vector<2x64xf32>
    %cst_42 = arith.constant dense<0.000000e+00> : vector<2xf32>
    %362 = vector.multi_reduction <add>, %361, %cst_42 [1] : vector<2x64xf32> to vector<2xf32>
    %363 = vector.shape_cast %362 : vector<2xf32> to vector<2x1xf32>
    %364 = tpu.concatenate %328, %333, %338, %343, %348, %353, %358, %363 in 1 : vector<2x1xf32>, vector<2x1xf32>, vector<2x1xf32>, vector<2x1xf32>, vector<2x1xf32>, vector<2x1xf32>, vector<2x1xf32>, vector<2x1xf32> -> vector<2x8xf32>
    %365 = vector.broadcast %323 : f32 to vector<2x8xf32>
    %366 = arith.addf %364, %365 : vector<2x8xf32>
    %cst_43 = arith.constant dense<0xFF800000> : vector<2xf32>
    %367 = vector.multi_reduction <maximumf>, %366, %cst_43 [1] : vector<2x8xf32> to vector<2xf32>
    %368 = vector.shape_cast %367 : vector<2xf32> to vector<2x1xf32>
    %369 = vector.broadcast %368 : vector<2x1xf32> to vector<2x8xf32>
    %370 = arith.subf %366, %369 : vector<2x8xf32>
    %371 = math.exp %370 : vector<2x8xf32>
    %cst_44 = arith.constant dense<0.000000e+00> : vector<2xf32>
    %372 = vector.multi_reduction <add>, %371, %cst_44 [1] : vector<2x8xf32> to vector<2xf32>
    %373 = vector.shape_cast %372 : vector<2xf32> to vector<2x1xf32>
    %374 = vector.broadcast %373 : vector<2x1xf32> to vector<2x8xf32>
    %375 = arith.divf %371, %374 : vector<2x8xf32>
    %c0_45 = arith.constant 0 : index
    %c0_46 = arith.constant 0 : index
    %376 = vector.load %arg7[%c0_45, %c0_46] : memref<2x8xf32, #tpu.memory_space<vmem>>, vector<2x8xf32>
    tpu.vector_store %arg7[%c0_45, %c0_46], %375 {strides = array<i32>} : memref<2x8xf32, #tpu.memory_space<vmem>>, vector<2x8xf32>,
    %377 = vector.extract_strided_slice %375 {offsets = [0, 0], sizes = [2, 1], strides = [1, 1]} : vector<2x8xf32> to vector<2x1xf32>
    %378 = vector.broadcast %377 : vector<2x1xf32> to vector<2x64xf32>
    %379 = arith.mulf %378, %324 : vector<2x64xf32>
    %380 = vector.extract_strided_slice %375 {offsets = [0, 1], sizes = [2, 1], strides = [1, 1]} : vector<2x8xf32> to vector<2x1xf32>
    %381 = vector.broadcast %380 : vector<2x1xf32> to vector<2x64xf32>
    %382 = arith.mulf %381, %329 : vector<2x64xf32>
    %383 = arith.addf %379, %382 : vector<2x64xf32>
    %384 = vector.extract_strided_slice %375 {offsets = [0, 2], sizes = [2, 1], strides = [1, 1]} : vector<2x8xf32> to vector<2x1xf32>
    %385 = vector.broadcast %384 : vector<2x1xf32> to vector<2x64xf32>
    %386 = arith.mulf %385, %334 : vector<2x64xf32>
    %387 = arith.addf %383, %386 : vector<2x64xf32>
    %388 = vector.extract_strided_slice %375 {offsets = [0, 3], sizes = [2, 1], strides = [1, 1]} : vector<2x8xf32> to vector<2x1xf32>
    %389 = vector.broadcast %388 : vector<2x1xf32> to vector<2x64xf32>
    %390 = arith.mulf %389, %339 : vector<2x64xf32>
    %391 = arith.addf %387, %390 : vector<2x64xf32>
    %392 = vector.extract_strided_slice %375 {offsets = [0, 4], sizes = [2, 1], strides = [1, 1]} : vector<2x8xf32> to vector<2x1xf32>
    %393 = vector.broadcast %392 : vector<2x1xf32> to vector<2x64xf32>
    %394 = arith.mulf %393, %344 : vector<2x64xf32>
    %395 = arith.addf %391, %394 : vector<2x64xf32>
    %396 = vector.extract_strided_slice %375 {offsets = [0, 5], sizes = [2, 1], strides = [1, 1]} : vector<2x8xf32> to vector<2x1xf32>
    %397 = vector.broadcast %396 : vector<2x1xf32> to vector<2x64xf32>
    %398 = arith.mulf %397, %349 : vector<2x64xf32>
    %399 = arith.addf %395, %398 : vector<2x64xf32>
    %400 = vector.extract_strided_slice %375 {offsets = [0, 6], sizes = [2, 1], strides = [1, 1]} : vector<2x8xf32> to vector<2x1xf32>
    %401 = vector.broadcast %400 : vector<2x1xf32> to vector<2x64xf32>
    %402 = arith.mulf %401, %354 : vector<2x64xf32>
    %403 = arith.addf %399, %402 : vector<2x64xf32>
    %404 = vector.extract_strided_slice %375 {offsets = [0, 7], sizes = [2, 1], strides = [1, 1]} : vector<2x8xf32> to vector<2x1xf32>
    %405 = vector.broadcast %404 : vector<2x1xf32> to vector<2x64xf32>
    %406 = arith.mulf %405, %359 : vector<2x64xf32>
    %407 = arith.addf %403, %406 : vector<2x64xf32>
    %c0_47 = arith.constant 0 : index
    %c0_48 = arith.constant 0 : index
    %408 = vector.load %arg6[%c0_47, %c0_48] : memref<2x64xf32, #tpu.memory_space<vmem>>, vector<2x64xf32>
    tpu.vector_store %arg6[%c0_47, %c0_48], %407 {strides = array<i32>} : memref<2x64xf32, #tpu.memory_space<vmem>>, vector<2x64xf32>,
    %409 = tpu.concatenate %324, %329, %334, %339, %344, %349, %354, %359 in 1 : vector<2x64xf32>, vector<2x64xf32>, vector<2x64xf32>, vector<2x64xf32>, vector<2x64xf32>, vector<2x64xf32>, vector<2x64xf32>, vector<2x64xf32> -> vector<2x512xf32>
    %c0_49 = arith.constant 0 : index
    %c0_50 = arith.constant 0 : index
    %410 = vector.load %arg8[%c0_49, %c0_50] : memref<2x512xf32, #tpu.memory_space<vmem>>, vector<2x512xf32>
    tpu.vector_store %arg8[%c0_49, %c0_50], %409 {strides = array<i32>} : memref<2x512xf32, #tpu.memory_space<vmem>>, vector<2x512xf32>,
    return
  }
}

</mosaic_0001>

<llo_original>
// kernel: lstm_attention_forward.1
$region0: #{lstm_attention_forward.1}
  #allocation0 [shape = 'u32[]', space=smem, size = 0x4, offset = 0x4, fixed_abs, tag = 'smem constant byte address 0x4 - core index']
  #allocation1 [shape = 'u32[72,128]{1,0:T(1,128)}', space=vmem, size = 0x9000, scoped, tag = 'internal scratch']
  #allocation2 [shape = 'f32[1,1]{1,0:T(1,128)S(6)}', space=smem, size = 0x200, scoped, tag = 'scoped memory for lstm_attention_forward.1']
  %s0 = inlined_call_operand.vmem [shape: f32[16,16], index: 0, kind: input, shape index: {}]
  %s1 = inlined_call_operand.vmem [shape: f32[16,256], index: 1, kind: input, shape index: {}]
  %s2 = inlined_call_operand.vmem [shape: f32[1,256], index: 2, kind: input, shape index: {}]
  %s3 = inlined_call_operand.hbm [shape: f32[64,256], index: 3, kind: input, shape index: {}]
  %s4 = inlined_call_operand.vmem [shape: f32[1,64], index: 4, kind: input, shape index: {}]
  %s5 = inlined_call_operand.<no memory space> [shape: f32[1,1], index: 5, kind: input, shape index: {}]
  %s6 = inlined_call_operand.hbm [shape: f32[2,64], index: 6, kind: output, shape index: {0}]
  %s7 = inlined_call_operand.hbm [shape: f32[2,8], index: 7, kind: output, shape index: {1}]
  %s8 = inlined_call_operand.vmem [shape: f32[2,512], index: 8, kind: output, shape index: {2}]
  %9 = xla_tuple %s6, %s7, %s8
  %s10 = sld [smem:[#allocation0]]
  $region54: #{lstm_attention_forward.1} parent=0
    _
  %s12 = ssub.s32 1, %s10
  %s13 = scalar_select 0, %s12, %s10
  %14 = sst [smem:[#allocation2]] %s5
  $region1: #{lstm_attention_forward.1} parent=0
    #allocation3 [shape = 'u8[65536]{0}', space=vmem, size = 0x10000, scoped, tag = 'input window, operand 3, single buffered']
    #allocation4 [shape = 's32[1]{0}', space=sflag, size = 0x4, scoped, tag = 'scoped memory for lstm_attention_forward.1']
    #allocation5 [shape = 's32[1]{0}', space=sflag, size = 0x4, scoped, tag = 'scoped memory for lstm_attention_forward.1']
    #allocation6 [shape = 'u8[1024]{0}', space=vmem, size = 0x400, scoped, tag = 'output window, operand 0, single buffered']
    #allocation7 [shape = 'u8[1024]{0}', space=vmem, size = 0x400, scoped, tag = 'output window, operand 1, single buffered']
    #allocation8 [shape = 's32[1]{0}', space=sflag, size = 0x4, scoped, tag = 'scoped memory for lstm_attention_forward.1']
    %15 = vsyncpa [#allocation4], 0
    %16 = vsyncpa [#allocation5], 0
    %17 = vsyncpa [#allocation8], 0
    // Predicated region
    $region2: #{lstm_attention_forward.1} parent=1 // pred_check
      _
    $region3: #{lstm_attention_forward.1} parent=1 // pred_check_branch
      %19 = sbr.rel (0) target = $region5
    $region4: #{lstm_attention_forward.1} parent=1 // pred_region
      _
    $region5: #{lstm_attention_forward.1} parent=1 // pred_fallthru
      _
    // Predicated region
    $region6: #{lstm_attention_forward.1} parent=1 // pred_check
      _
    $region7: #{lstm_attention_forward.1} parent=1 // pred_check_branch
      %21 = sbr.rel (0) target = $region9
    $region8: #{lstm_attention_forward.1} parent=1 // pred_region
      _
    $region9: #{lstm_attention_forward.1} parent=1 // pred_fallthru
      _
    // Predicated region
    $region10: #{lstm_attention_forward.1} parent=1 // pred_check
      _
    $region11: #{lstm_attention_forward.1} parent=1 // pred_check_branch
      %23 = sbr.rel (0) target = $region13
    $region12: #{lstm_attention_forward.1} parent=1 // pred_region
      _
    $region13: #{lstm_attention_forward.1} parent=1 // pred_fallthru
      _
    // Predicated region
    $region14: #{lstm_attention_forward.1} parent=1 // pred_check
      _
    $region15: #{lstm_attention_forward.1} parent=1 // pred_check_branch
      %25 = sbr.rel (0) target = $region17
    $region16: #{lstm_attention_forward.1} parent=1 // pred_region
      %27 = vsyncadd [#allocation4], 0
      %s28 = sshll.u32 %s3, 4
      %s29 = int_to_ptr.hbm [resolvable:$true] %s28
      %s30 = sshll.u32 [#allocation3], 4
      %s31 = int_to_ptr.vmem [resolvable:$true] %s30
      %36 = dma.hbm_to_vmem [thread:$0]  %s29, 2048, %s31, [#allocation4], 256, 256, 16
    $region17: #{lstm_attention_forward.1} parent=1 // pred_fallthru
      _
    // Predicated region
    $region18: #{lstm_attention_forward.1} parent=1 // pred_check
      _
    $region19: #{lstm_attention_forward.1} parent=1 // pred_check_branch
      %38 = sbr.rel (0) target = $region21
    $region20: #{lstm_attention_forward.1} parent=1 // pred_region
      _
    $region21: #{lstm_attention_forward.1} parent=1 // pred_fallthru
      _
    // Predicated region
    $region22: #{lstm_attention_forward.1} parent=1 // pred_check
      _
    $region23: #{lstm_attention_forward.1} parent=1 // pred_check_branch
      %40 = sbr.rel (0) target = $region25
    $region24: #{lstm_attention_forward.1} parent=1 // pred_region
      _
    $region25: #{lstm_attention_forward.1} parent=1 // pred_fallthru
      _
    // Predicated region
    $region26: #{lstm_attention_forward.1} parent=1 // pred_check
      _
    $region27: #{lstm_attention_forward.1} parent=1 // pred_check_branch
      %42 = sbr.rel (0) target = $region29
    $region28: #{lstm_attention_forward.1} parent=1 // pred_region
      %44 = dma.done [#allocation4], 2048
    $region29: #{lstm_attention_forward.1} parent=1 // pred_fallthru
      _
    %v45 = vld [vmem:[%s0] sm:$0xff]
    %v46 = vld [vmem:[%s0 + $0x8] sm:$0xff]
    %v47 = vld [vmem:[%s1] sm:$0xff]
    %v48 = vld [vmem:[%s1 + $0x8] sm:$0xff]
    %v49 = vld [vmem:[%s1 + $0x10] sm:$0xff]
    %v50 = vld [vmem:[%s1 + $0x18] sm:$0xff]
    %v51 = vld [vmem:[%s2] sm:$0x3]
    %v53 = vperm.slane %v51, 0
    %v54 = vperm.slane %v51, 1
    %vm57 = vcmask 130048
    %v59 = vsel %vm57, %v45, 0
    %v62 = vsel %vm57, %v46, 0
    %64 = vmatpush.msra.mxu0 0.0
    %65 = vmatpush.msra.mxu0 0.0
    %66 = vmatpush.msra.mxu0 0.0
    %67 = vmatpush.msra.mxu0 0.0
    %68 = vmatpush.msra.mxu0 0.0
    %69 = vmatpush.msra.mxu0 0.0
    %70 = vmatpush.msra.mxu0 0.0
    %71 = vmatpush.msra.mxu0 0.0
    %72 = vmatpush.msra.mxu0 0.0
    %73 = vmatpush.msra.mxu0 0.0
    %74 = vmatpush.msra.mxu0 0.0
    %75 = vmatpush.msra.mxu0 0.0
    %76 = vmatpush.msra.mxu0 0.0
    %77 = vmatpush.msra.mxu0 0.0
    %78 = vmatpush.msra.mxu0 %v49
    %79 = vmatpush.msra.mxu0 %v47
    %80 = vmatmul.f32.gmra.mxu0 %v59
    %v81 = vpop.f32.mrf.mxu0
    %v82 = vadd.f32 %v53, %v81
    %83 = vmatmul.f32.gmra.mxu0 %v62
    %v84 = vpop.f32.mrf.mxu0
    %v85 = vadd.f32 %v53, %v84
    %86 = vdwg.mxu0
    %87 = vmatpush.msra.mxu0 0.0
    %88 = vmatpush.msra.mxu0 0.0
    %89 = vmatpush.msra.mxu0 0.0
    %90 = vmatpush.msra.mxu0 0.0
    %91 = vmatpush.msra.mxu0 0.0
    %92 = vmatpush.msra.mxu0 0.0
    %93 = vmatpush.msra.mxu0 0.0
    %94 = vmatpush.msra.mxu0 0.0
    %95 = vmatpush.msra.mxu0 0.0
    %96 = vmatpush.msra.mxu0 0.0
    %97 = vmatpush.msra.mxu0 0.0
    %98 = vmatpush.msra.mxu0 0.0
    %99 = vmatpush.msra.mxu0 0.0
    %100 = vmatpush.msra.mxu0 0.0
    %101 = vmatpush.msra.mxu0 %v50
    %102 = vmatpush.msra.mxu0 %v48
    %103 = vmatmul.f32.gmra.mxu0 %v59
    %v104 = vpop.f32.mrf.mxu0
    %v105 = vadd.f32 %v54, %v104
    %106 = vmatmul.f32.gmra.mxu0 %v62
    %v107 = vpop.f32.mrf.mxu0
    %v108 = vadd.f32 %v54, %v107
    %109 = vdwg.mxu0
    %v110 = vld [vmem:[#allocation3] sm:$0xff]
    %v111 = vld [vmem:[#allocation3 + $0x8] sm:$0xff]
    %v112 = vld [vmem:[#allocation3 + $0x10] sm:$0xff]
    %v113 = vld [vmem:[#allocation3 + $0x18] sm:$0xff]
    %v114 = vld [vmem:[#allocation3 + $0x20] sm:$0xff]
    %v115 = vld [vmem:[#allocation3 + $0x28] sm:$0xff]
    %v116 = vld [vmem:[#allocation3 + $0x30] sm:$0xff]
    %v117 = vld [vmem:[#allocation3 + $0x38] sm:$0xff]
    %v118 = vld [vmem:[#allocation3 + $0x40] sm:$0xff]
    %v119 = vld [vmem:[#allocation3 + $0x48] sm:$0xff]
    %v120 = vld [vmem:[#allocation3 + $0x50] sm:$0xff]
    %v121 = vld [vmem:[#allocation3 + $0x58] sm:$0xff]
    %v122 = vld [vmem:[#allocation3 + $0x60] sm:$0xff]
    %v123 = vld [vmem:[#allocation3 + $0x68] sm:$0xff]
    %v124 = vld [vmem:[#allocation3 + $0x70] sm:$0xff]
    %v125 = vld [vmem:[#allocation3 + $0x78] sm:$0xff]
    %v126 = vxor.u32 %v82, 2147483648
    %v127 = vmul.f32 %v126, 1.442695
    %v128 = vpow.pop %v127
    %v129 = vadd.f32 %v128, 1.0
    %v130 = vrcp.pop %v129
    %v131 = vmul.f32 %v129, %v130
    %v132 = vsub.f32 1.0, %v131
    %v133 = vmul.f32 %v130, %v132
    %v134 = vadd.f32 %v130, %v133
    %vm135 = vweird.f32 %v129
    %vm136 = vweird.f32 %v130
    %vm137 = vmor %vm135, %vm136
    %v138 = vsel %vm137, %v130, %v134
    %v139 = vand.u32 2147483647, %v129
    %vm140 = vcmp.eq.f32.partialorder %v139, 8.507059e+37
    %v141 = vand.u32 %v129, 2147483648
    %v142 = vor.u32 1.1754944e-38, %v141
    %v143 = vsel %vm140, %v142, %v138
    %v144 = vmul.f32 1.0, %v143
    %v145 = vtanh.pop %v82
    %v146 = vmul.f32 %v144, 0.0
    %148 = vrot.lane.b32.xlu0 %v145, 32
    %v149 = vpop.permute.xlu0 %148
    %v151 = vmul.f32 %v144, %v149
    %153 = vrot.lane.b32.xlu0 %v151, 32
    %v154 = vpop.permute.xlu0 %153
    %v156 = vadd.f32 %v146, %v154
    %v157 = vtanh.pop %v156
    %159 = vrot.lane.b32.xlu0 %v157, 32
    %v160 = vpop.permute.xlu0 %159
    %v162 = vmul.f32 %v144, %v160
    %v163 = vxor.u32 %v108, 2147483648
    %v164 = vmul.f32 %v163, 1.442695
    %v165 = vpow.pop %v164
    %v166 = vadd.f32 %v165, 1.0
    %v167 = vrcp.pop %v166
    %v168 = vmul.f32 %v166, %v167
    %v169 = vsub.f32 1.0, %v168
    %v170 = vmul.f32 %v167, %v169
    %v171 = vadd.f32 %v167, %v170
    %vm172 = vweird.f32 %v166
    %vm173 = vweird.f32 %v167
    %vm174 = vmor %vm172, %vm173
    %v175 = vsel %vm174, %v167, %v171
    %v176 = vand.u32 2147483647, %v166
    %vm177 = vcmp.eq.f32.partialorder %v176, 8.507059e+37
    %v178 = vand.u32 %v166, 2147483648
    %v179 = vor.u32 1.1754944e-38, %v178
    %v180 = vsel %vm177, %v179, %v175
    %v181 = vmul.f32 1.0, %v180
    %v182 = vtanh.pop %v108
    %v183 = vmul.f32 %v181, 0.0
    %185 = vrot.lane.b32.xlu0 %v182, 32
    %v186 = vpop.permute.xlu0 %185
    %v188 = vmul.f32 %v181, %v186
    %190 = vrot.lane.b32.xlu0 %v188, 32
    %v191 = vpop.permute.xlu0 %190
    %v193 = vadd.f32 %v183, %v191
    %v194 = vtanh.pop %v193
    %196 = vrot.lane.b32.xlu0 %v194, 32
    %v197 = vpop.permute.xlu0 %196
    %v199 = vmul.f32 %v181, %v197
    %201 = vrot.lane.b32.xlu0 %v162, 64
    %v202 = vpop.permute.xlu0 %201
    %v205 = vrot.slane %v199, 6
    %206 = vrot.lane.b32.xlu0 %v205, 96
    %v207 = vpop.permute.xlu0 %206
    %vm209 = vcmask 261120
    %v210 = vsel %vm209, %v202, %v207
    %vm211 = vcmask 523264
    %v213 = vsel %vm211, %v210, 0
    %215 = vmatpush.msra.mxu0 0.0
    %216 = vmatpush.msra.mxu0 0.0
    %217 = vmatpush.msra.mxu0 0.0
    %218 = vmatpush.msra.mxu0 0.0
    %219 = vmatpush.msra.mxu0 0.0
    %220 = vmatpush.msra.mxu0 0.0
    %221 = vmatpush.msra.mxu0 0.0
    %222 = vmatpush.msra.mxu0 0.0
    %223 = vmatpush.msra.mxu0 %v124
    %224 = vmatpush.msra.mxu0 %v122
    %225 = vmatpush.msra.mxu0 %v120
    %226 = vmatpush.msra.mxu0 %v118
    %227 = vmatpush.msra.mxu0 %v116
    %228 = vmatpush.msra.mxu0 %v114
    %229 = vmatpush.msra.mxu0 %v112
    %230 = vmatpush.msra.mxu0 %v110
    %231 = vmatmul.f32.gmra.mxu0 %v213
    %v232 = vpop.f32.mrf.mxu0
    %v233 = vadd.f32 0.0, %v232
    %234 = vdwg.mxu0
    %235 = vmatpush.msra.mxu0 0.0
    %236 = vmatpush.msra.mxu0 0.0
    %237 = vmatpush.msra.mxu0 0.0
    %238 = vmatpush.msra.mxu0 0.0
    %239 = vmatpush.msra.mxu0 0.0
    %240 = vmatpush.msra.mxu0 0.0
    %241 = vmatpush.msra.mxu0 0.0
    %242 = vmatpush.msra.mxu0 0.0
    %243 = vmatpush.msra.mxu0 %v125
    %244 = vmatpush.msra.mxu0 %v123
    %245 = vmatpush.msra.mxu0 %v121
    %246 = vmatpush.msra.mxu0 %v119
    %247 = vmatpush.msra.mxu0 %v117
    %248 = vmatpush.msra.mxu0 %v115
    %249 = vmatpush.msra.mxu0 %v113
    %250 = vmatpush.msra.mxu0 %v111
    %251 = vmatmul.f32.gmra.mxu0 %v213
    %v252 = vpop.f32.mrf.mxu0
    %v253 = vadd.f32 0.0, %v252
    %254 = vdwg.mxu0
    %v256 = vrot.slane %v233, 6
    %v258 = vadd.f32 %v82, %v256
    %v260 = vrot.slane %v253, 4
    %v262 = vadd.f32 %v108, %v260
    %v263 = vxor.u32 %v258, 2147483648
    %v264 = vmul.f32 %v263, 1.442695
    %v265 = vpow.pop %v264
    %v266 = vadd.f32 %v265, 1.0
    %v267 = vrcp.pop %v266
    %v268 = vmul.f32 %v266, %v267
    %v269 = vsub.f32 1.0, %v268
    %v270 = vmul.f32 %v267, %v269
    %v271 = vadd.f32 %v267, %v270
    %vm272 = vweird.f32 %v266
    %vm273 = vweird.f32 %v267
    %vm274 = vmor %vm272, %vm273
    %v275 = vsel %vm274, %v267, %v271
    %v276 = vand.u32 2147483647, %v266
    %vm277 = vcmp.eq.f32.partialorder %v276, 8.507059e+37
    %v278 = vand.u32 %v266, 2147483648
    %v279 = vor.u32 1.1754944e-38, %v278
    %v280 = vsel %vm277, %v279, %v275
    %v281 = vmul.f32 1.0, %v280
    %v282 = vtanh.pop %v258
    %v284 = vrot.slane %v156, 6
    %v286 = vmul.f32 %v281, %v284
    %288 = vrot.lane.b32.xlu0 %v282, 32
    %v289 = vpop.permute.xlu0 %288
    %v291 = vmul.f32 %v281, %v289
    %293 = vrot.lane.b32.xlu0 %v291, 32
    %v294 = vpop.permute.xlu0 %293
    %v296 = vadd.f32 %v286, %v294
    %v297 = vtanh.pop %v296
    %299 = vrot.lane.b32.xlu0 %v297, 32
    %v300 = vpop.permute.xlu0 %299
    %v302 = vmul.f32 %v281, %v300
    %v303 = vxor.u32 %v262, 2147483648
    %v304 = vmul.f32 %v303, 1.442695
    %v305 = vpow.pop %v304
    %v306 = vadd.f32 %v305, 1.0
    %v307 = vrcp.pop %v306
    %v308 = vmul.f32 %v306, %v307
    %v309 = vsub.f32 1.0, %v308
    %v310 = vmul.f32 %v307, %v309
    %v311 = vadd.f32 %v307, %v310
    %vm312 = vweird.f32 %v306
    %vm313 = vweird.f32 %v307
    %vm314 = vmor %vm312, %vm313
    %v315 = vsel %vm314, %v307, %v311
    %v316 = vand.u32 2147483647, %v306
    %vm317 = vcmp.eq.f32.partialorder %v316, 8.507059e+37
    %v318 = vand.u32 %v306, 2147483648
    %v319 = vor.u32 1.1754944e-38, %v318
    %v320 = vsel %vm317, %v319, %v315
    %v321 = vmul.f32 1.0, %v320
    %v322 = vtanh.pop %v262
    %v324 = vrot.slane %v193, 2
    %v326 = vmul.f32 %v321, %v324
    %328 = vrot.lane.b32.xlu0 %v322, 32
    %v329 = vpop.permute.xlu0 %328
    %v331 = vmul.f32 %v321, %v329
    %333 = vrot.lane.b32.xlu0 %v331, 32
    %v334 = vpop.permute.xlu0 %333
    %v336 = vadd.f32 %v326, %v334
    %v337 = vtanh.pop %v336
    %339 = vrot.lane.b32.xlu0 %v337, 32
    %v340 = vpop.permute.xlu0 %339
    %v342 = vmul.f32 %v321, %v340
    %344 = vrot.lane.b32.xlu0 %v302, 64
    %v345 = vpop.permute.xlu0 %344
    %v348 = vrot.slane %v342, 2
    %349 = vrot.lane.b32.xlu0 %v348, 96
    %v350 = vpop.permute.xlu0 %349
    %v352 = vsel %vm209, %v345, %v350
    %v354 = vrot.slane %v352, 2
    %v355 = vsel %vm211, %v354, 0
    %357 = vmatpush.msra.mxu0 0.0
    %358 = vmatpush.msra.mxu0 0.0
    %359 = vmatpush.msra.mxu0 0.0
    %360 = vmatpush.msra.mxu0 0.0
    %361 = vmatpush.msra.mxu0 0.0
    %362 = vmatpush.msra.mxu0 0.0
    %363 = vmatpush.msra.mxu0 0.0
    %364 = vmatpush.msra.mxu0 0.0
    %365 = vmatpush.msra.mxu0 %v124
    %366 = vmatpush.msra.mxu0 %v122
    %367 = vmatpush.msra.mxu0 %v120
    %368 = vmatpush.msra.mxu0 %v118
    %369 = vmatpush.msra.mxu0 %v116
    %370 = vmatpush.msra.mxu0 %v114
    %371 = vmatpush.msra.mxu0 %v112
    %372 = vmatpush.msra.mxu0 %v110
    %373 = vmatmul.f32.gmra.mxu0 %v355
    %v374 = vpop.f32.mrf.mxu0
    %v375 = vadd.f32 0.0, %v374
    %376 = vdwg.mxu0
    %377 = vmatpush.msra.mxu0 0.0
    %378 = vmatpush.msra.mxu0 0.0
    %379 = vmatpush.msra.mxu0 0.0
    %380 = vmatpush.msra.mxu0 0.0
    %381 = vmatpush.msra.mxu0 0.0
    %382 = vmatpush.msra.mxu0 0.0
    %383 = vmatpush.msra.mxu0 0.0
    %384 = vmatpush.msra.mxu0 0.0
    %385 = vmatpush.msra.mxu0 %v125
    %386 = vmatpush.msra.mxu0 %v123
    %387 = vmatpush.msra.mxu0 %v121
    %388 = vmatpush.msra.mxu0 %v119
    %389 = vmatpush.msra.mxu0 %v117
    %390 = vmatpush.msra.mxu0 %v115
    %391 = vmatpush.msra.mxu0 %v113
    %392 = vmatpush.msra.mxu0 %v111
    %393 = vmatmul.f32.gmra.mxu0 %v355
    %v394 = vpop.f32.mrf.mxu0
    %v395 = vadd.f32 0.0, %v394
    %396 = vdwg.mxu0
    %v398 = vrot.slane %v375, 4
    %v400 = vadd.f32 %v82, %v398
    %v402 = vrot.slane %v395, 6
    %v404 = vadd.f32 %v108, %v402
    %v405 = vxor.u32 %v400, 2147483648
    %v406 = vmul.f32 %v405, 1.442695
    %v407 = vpow.pop %v406
    %v408 = vadd.f32 %v407, 1.0
    %v409 = vrcp.pop %v408
    %v410 = vmul.f32 %v408, %v409
    %v411 = vsub.f32 1.0, %v410
    %v412 = vmul.f32 %v409, %v411
    %v413 = vadd.f32 %v409, %v412
    %vm414 = vweird.f32 %v408
    %vm415 = vweird.f32 %v409
    %vm416 = vmor %vm414, %vm415
    %v417 = vsel %vm416, %v409, %v413
    %v418 = vand.u32 2147483647, %v408
    %vm419 = vcmp.eq.f32.partialorder %v418, 8.507059e+37
    %v420 = vand.u32 %v408, 2147483648
    %v421 = vor.u32 1.1754944e-38, %v420
    %v422 = vsel %vm419, %v421, %v417
    %v423 = vmul.f32 1.0, %v422
    %v424 = vtanh.pop %v400
    %v426 = vrot.slane %v296, 6
    %v428 = vmul.f32 %v423, %v426
    %430 = vrot.lane.b32.xlu0 %v424, 32
    %v431 = vpop.permute.xlu0 %430
    %v433 = vmul.f32 %v423, %v431
    %435 = vrot.lane.b32.xlu0 %v433, 32
    %v436 = vpop.permute.xlu0 %435
    %v438 = vadd.f32 %v428, %v436
    %v439 = vtanh.pop %v438
    %441 = vrot.lane.b32.xlu0 %v439, 32
    %v442 = vpop.permute.xlu0 %441
    %v444 = vmul.f32 %v423, %v442
    %v445 = vxor.u32 %v404, 2147483648
    %v446 = vmul.f32 %v445, 1.442695
    %v447 = vpow.pop %v446
    %v448 = vadd.f32 %v447, 1.0
    %v449 = vrcp.pop %v448
    %v450 = vmul.f32 %v448, %v449
    %v451 = vsub.f32 1.0, %v450
    %v452 = vmul.f32 %v449, %v451
    %v453 = vadd.f32 %v449, %v452
    %vm454 = vweird.f32 %v448
    %vm455 = vweird.f32 %v449
    %vm456 = vmor %vm454, %vm455
    %v457 = vsel %vm456, %v449, %v453
    %v458 = vand.u32 2147483647, %v448
    %vm459 = vcmp.eq.f32.partialorder %v458, 8.507059e+37
    %v460 = vand.u32 %v448, 2147483648
    %v461 = vor.u32 1.1754944e-38, %v460
    %v462 = vsel %vm459, %v461, %v457
    %v463 = vmul.f32 1.0, %v462
    %v464 = vtanh.pop %v404
    %v466 = vrot.slane %v336, 2
    %v468 = vmul.f32 %v463, %v466
    %470 = vrot.lane.b32.xlu0 %v464, 32
    %v471 = vpop.permute.xlu0 %470
    %v473 = vmul.f32 %v463, %v471
    %475 = vrot.lane.b32.xlu0 %v473, 32
    %v476 = vpop.permute.xlu0 %475
    %v478 = vadd.f32 %v468, %v476
    %v479 = vtanh.pop %v478
    %481 = vrot.lane.b32.xlu0 %v479, 32
    %v482 = vpop.permute.xlu0 %481
    %v484 = vmul.f32 %v463, %v482
    %486 = vrot.lane.b32.xlu0 %v444, 64
    %v487 = vpop.permute.xlu0 %486
    %v490 = vrot.slane %v484, 6
    %491 = vrot.lane.b32.xlu0 %v490, 96
    %v492 = vpop.permute.xlu0 %491
    %v494 = vsel %vm209, %v487, %v492
    %v496 = vrot.slane %v494, 4
    %v497 = vsel %vm211, %v496, 0
    %499 = vmatpush.msra.mxu0 0.0
    %500 = vmatpush.msra.mxu0 0.0
    %501 = vmatpush.msra.mxu0 0.0
    %502 = vmatpush.msra.mxu0 0.0
    %503 = vmatpush.msra.mxu0 0.0
    %504 = vmatpush.msra.mxu0 0.0
    %505 = vmatpush.msra.mxu0 0.0
    %506 = vmatpush.msra.mxu0 0.0
    %507 = vmatpush.msra.mxu0 %v124
    %508 = vmatpush.msra.mxu0 %v122
    %509 = vmatpush.msra.mxu0 %v120
    %510 = vmatpush.msra.mxu0 %v118
    %511 = vmatpush.msra.mxu0 %v116
    %512 = vmatpush.msra.mxu0 %v114
    %513 = vmatpush.msra.mxu0 %v112
    %514 = vmatpush.msra.mxu0 %v110
    %515 = vmatmul.f32.gmra.mxu0 %v497
    %v516 = vpop.f32.mrf.mxu0
    %v517 = vadd.f32 0.0, %v516
    %518 = vdwg.mxu0
    %519 = vmatpush.msra.mxu0 0.0
    %520 = vmatpush.msra.mxu0 0.0
    %521 = vmatpush.msra.mxu0 0.0
    %522 = vmatpush.msra.mxu0 0.0
    %523 = vmatpush.msra.mxu0 0.0
    %524 = vmatpush.msra.mxu0 0.0
    %525 = vmatpush.msra.mxu0 0.0
    %526 = vmatpush.msra.mxu0 0.0
    %527 = vmatpush.msra.mxu0 %v125
    %528 = vmatpush.msra.mxu0 %v123
    %529 = vmatpush.msra.mxu0 %v121
    %530 = vmatpush.msra.mxu0 %v119
    %531 = vmatpush.msra.mxu0 %v117
    %532 = vmatpush.msra.mxu0 %v115
    %533 = vmatpush.msra.mxu0 %v113
    %534 = vmatpush.msra.mxu0 %v111
    %535 = vmatmul.f32.gmra.mxu0 %v497
    %v536 = vpop.f32.mrf.mxu0
    %v537 = vadd.f32 0.0, %v536
    %538 = vdwg.mxu0
    %v540 = vrot.slane %v517, 2
    %v542 = vadd.f32 %v82, %v540
    %v543 = vadd.f32 %v108, %v537
    %v544 = vxor.u32 %v542, 2147483648
    %v545 = vmul.f32 %v544, 1.442695
    %v546 = vpow.pop %v545
    %v547 = vadd.f32 %v546, 1.0
    %v548 = vrcp.pop %v547
    %v549 = vmul.f32 %v547, %v548
    %v550 = vsub.f32 1.0, %v549
    %v551 = vmul.f32 %v548, %v550
    %v552 = vadd.f32 %v548, %v551
    %vm553 = vweird.f32 %v547
    %vm554 = vweird.f32 %v548
    %vm555 = vmor %vm553, %vm554
    %v556 = vsel %vm555, %v548, %v552
    %v557 = vand.u32 2147483647, %v547
    %vm558 = vcmp.eq.f32.partialorder %v557, 8.507059e+37
    %v559 = vand.u32 %v547, 2147483648
    %v560 = vor.u32 1.1754944e-38, %v559
    %v561 = vsel %vm558, %v560, %v556
    %v562 = vmul.f32 1.0, %v561
    %v563 = vtanh.pop %v542
    %v565 = vrot.slane %v438, 6
    %v567 = vmul.f32 %v562, %v565
    %569 = vrot.lane.b32.xlu0 %v563, 32
    %v570 = vpop.permute.xlu0 %569
    %v572 = vmul.f32 %v562, %v570
    %574 = vrot.lane.b32.xlu0 %v572, 32
    %v575 = vpop.permute.xlu0 %574
    %v577 = vadd.f32 %v567, %v575
    %v578 = vtanh.pop %v577
    %580 = vrot.lane.b32.xlu0 %v578, 32
    %v581 = vpop.permute.xlu0 %580
    %v583 = vmul.f32 %v562, %v581
    %v584 = vxor.u32 %v543, 2147483648
    %v585 = vmul.f32 %v584, 1.442695
    %v586 = vpow.pop %v585
    %v587 = vadd.f32 %v586, 1.0
    %v588 = vrcp.pop %v587
    %v589 = vmul.f32 %v587, %v588
    %v590 = vsub.f32 1.0, %v589
    %v591 = vmul.f32 %v588, %v590
    %v592 = vadd.f32 %v588, %v591
    %vm593 = vweird.f32 %v587
    %vm594 = vweird.f32 %v588
    %vm595 = vmor %vm593, %vm594
    %v596 = vsel %vm595, %v588, %v592
    %v597 = vand.u32 2147483647, %v587
    %vm598 = vcmp.eq.f32.partialorder %v597, 8.507059e+37
    %v599 = vand.u32 %v587, 2147483648
    %v600 = vor.u32 1.1754944e-38, %v599
    %v601 = vsel %vm598, %v600, %v596
    %v602 = vmul.f32 1.0, %v601
    %v603 = vtanh.pop %v543
    %v605 = vrot.slane %v478, 2
    %v607 = vmul.f32 %v602, %v605
    %609 = vrot.lane.b32.xlu0 %v603, 32
    %v610 = vpop.permute.xlu0 %609
    %v612 = vmul.f32 %v602, %v610
    %614 = vrot.lane.b32.xlu0 %v612, 32
    %v615 = vpop.permute.xlu0 %614
    %v617 = vadd.f32 %v607, %v615
    %v618 = vtanh.pop %v617
    %620 = vrot.lane.b32.xlu0 %v618, 32
    %v621 = vpop.permute.xlu0 %620
    %v623 = vmul.f32 %v602, %v621
    %625 = vrot.lane.b32.xlu0 %v583, 64
    %v626 = vpop.permute.xlu0 %625
    %v629 = vrot.slane %v623, 2
    %630 = vrot.lane.b32.xlu0 %v629, 96
    %v631 = vpop.permute.xlu0 %630
    %v633 = vsel %vm209, %v626, %v631
    %v635 = vrot.slane %v633, 6
    %v636 = vsel %vm211, %v635, 0
    %638 = vmatpush.msra.mxu0 0.0
    %639 = vmatpush.msra.mxu0 0.0
    %640 = vmatpush.msra.mxu0 0.0
    %641 = vmatpush.msra.mxu0 0.0
    %642 = vmatpush.msra.mxu0 0.0
    %643 = vmatpush.msra.mxu0 0.0
    %644 = vmatpush.msra.mxu0 0.0
    %645 = vmatpush.msra.mxu0 0.0
    %646 = vmatpush.msra.mxu0 %v124
    %647 = vmatpush.msra.mxu0 %v122
    %648 = vmatpush.msra.mxu0 %v120
    %649 = vmatpush.msra.mxu0 %v118
    %650 = vmatpush.msra.mxu0 %v116
    %651 = vmatpush.msra.mxu0 %v114
    %652 = vmatpush.msra.mxu0 %v112
    %653 = vmatpush.msra.mxu0 %v110
    %654 = vmatmul.f32.gmra.mxu0 %v636
    %v655 = vpop.f32.mrf.mxu0
    %v656 = vadd.f32 0.0, %v655
    %657 = vdwg.mxu0
    %658 = vmatpush.msra.mxu0 0.0
    %659 = vmatpush.msra.mxu0 0.0
    %660 = vmatpush.msra.mxu0 0.0
    %661 = vmatpush.msra.mxu0 0.0
    %662 = vmatpush.msra.mxu0 0.0
    %663 = vmatpush.msra.mxu0 0.0
    %664 = vmatpush.msra.mxu0 0.0
    %665 = vmatpush.msra.mxu0 0.0
    %666 = vmatpush.msra.mxu0 %v125
    %667 = vmatpush.msra.mxu0 %v123
    %668 = vmatpush.msra.mxu0 %v121
    %669 = vmatpush.msra.mxu0 %v119
    %670 = vmatpush.msra.mxu0 %v117
    %671 = vmatpush.msra.mxu0 %v115
    %672 = vmatpush.msra.mxu0 %v113
    %673 = vmatpush.msra.mxu0 %v111
    %674 = vmatmul.f32.gmra.mxu0 %v636
    %v675 = vpop.f32.mrf.mxu0
    %v676 = vadd.f32 0.0, %v675
    %677 = vdwg.mxu0
    %v678 = vadd.f32 %v85, %v656
    %v680 = vrot.slane %v676, 2
    %v682 = vadd.f32 %v105, %v680
    %v683 = vxor.u32 %v678, 2147483648
    %v684 = vmul.f32 %v683, 1.442695
    %v685 = vpow.pop %v684
    %v686 = vadd.f32 %v685, 1.0
    %v687 = vrcp.pop %v686
    %v688 = vmul.f32 %v686, %v687
    %v689 = vsub.f32 1.0, %v688
    %v690 = vmul.f32 %v687, %v689
    %v691 = vadd.f32 %v687, %v690
    %vm692 = vweird.f32 %v686
    %vm693 = vweird.f32 %v687
    %vm694 = vmor %vm692, %vm693
    %v695 = vsel %vm694, %v687, %v691
    %v696 = vand.u32 2147483647, %v686
    %vm697 = vcmp.eq.f32.partialorder %v696, 8.507059e+37
    %v698 = vand.u32 %v686, 2147483648
    %v699 = vor.u32 1.1754944e-38, %v698
    %v700 = vsel %vm697, %v699, %v695
    %v701 = vmul.f32 1.0, %v700
    %v702 = vtanh.pop %v678
    %v704 = vrot.slane %v577, 6
    %v706 = vmul.f32 %v701, %v704
    %708 = vrot.lane.b32.xlu0 %v702, 32
    %v709 = vpop.permute.xlu0 %708
    %v711 = vmul.f32 %v701, %v709
    %713 = vrot.lane.b32.xlu0 %v711, 32
    %v714 = vpop.permute.xlu0 %713
    %v716 = vadd.f32 %v706, %v714
    %v717 = vtanh.pop %v716
    %719 = vrot.lane.b32.xlu0 %v717, 32
    %v720 = vpop.permute.xlu0 %719
    %v722 = vmul.f32 %v701, %v720
    %v723 = vxor.u32 %v682, 2147483648
    %v724 = vmul.f32 %v723, 1.442695
    %v725 = vpow.pop %v724
    %v726 = vadd.f32 %v725, 1.0
    %v727 = vrcp.pop %v726
    %v728 = vmul.f32 %v726, %v727
    %v729 = vsub.f32 1.0, %v728
    %v730 = vmul.f32 %v727, %v729
    %v731 = vadd.f32 %v727, %v730
    %vm732 = vweird.f32 %v726
    %vm733 = vweird.f32 %v727
    %vm734 = vmor %vm732, %vm733
    %v735 = vsel %vm734, %v727, %v731
    %v736 = vand.u32 2147483647, %v726
    %vm737 = vcmp.eq.f32.partialorder %v736, 8.507059e+37
    %v738 = vand.u32 %v726, 2147483648
    %v739 = vor.u32 1.1754944e-38, %v738
    %v740 = vsel %vm737, %v739, %v735
    %v741 = vmul.f32 1.0, %v740
    %v742 = vtanh.pop %v682
    %v744 = vrot.slane %v617, 2
    %v746 = vmul.f32 %v741, %v744
    %748 = vrot.lane.b32.xlu0 %v742, 32
    %v749 = vpop.permute.xlu0 %748
    %v751 = vmul.f32 %v741, %v749
    %753 = vrot.lane.b32.xlu0 %v751, 32
    %v754 = vpop.permute.xlu0 %753
    %v756 = vadd.f32 %v746, %v754
    %v757 = vtanh.pop %v756
    %759 = vrot.lane.b32.xlu0 %v757, 32
    %v760 = vpop.permute.xlu0 %759
    %v762 = vmul.f32 %v741, %v760
    %764 = vrot.lane.b32.xlu0 %v722, 64
    %v765 = vpop.permute.xlu0 %764
    %v768 = vrot.slane %v762, 6
    %769 = vrot.lane.b32.xlu0 %v768, 96
    %v770 = vpop.permute.xlu0 %769
    %v772 = vsel %vm209, %v765, %v770
    %v774 = vsel %vm211, %v772, 0
    %776 = vmatpush.msra.mxu0 0.0
    %777 = vmatpush.msra.mxu0 0.0
    %778 = vmatpush.msra.mxu0 0.0
    %779 = vmatpush.msra.mxu0 0.0
    %780 = vmatpush.msra.mxu0 0.0
    %781 = vmatpush.msra.mxu0 0.0
    %782 = vmatpush.msra.mxu0 0.0
    %783 = vmatpush.msra.mxu0 0.0
    %784 = vmatpush.msra.mxu0 %v124
    %785 = vmatpush.msra.mxu0 %v122
    %786 = vmatpush.msra.mxu0 %v120
    %787 = vmatpush.msra.mxu0 %v118
    %788 = vmatpush.msra.mxu0 %v116
    %789 = vmatpush.msra.mxu0 %v114
    %790 = vmatpush.msra.mxu0 %v112
    %791 = vmatpush.msra.mxu0 %v110
    %792 = vmatmul.f32.gmra.mxu0 %v774
    %v793 = vpop.f32.mrf.mxu0
    %v794 = vadd.f32 0.0, %v793
    %795 = vdwg.mxu0
    %796 = vmatpush.msra.mxu0 0.0
    %797 = vmatpush.msra.mxu0 0.0
    %798 = vmatpush.msra.mxu0 0.0
    %799 = vmatpush.msra.mxu0 0.0
    %800 = vmatpush.msra.mxu0 0.0
    %801 = vmatpush.msra.mxu0 0.0
    %802 = vmatpush.msra.mxu0 0.0
    %803 = vmatpush.msra.mxu0 0.0
    %804 = vmatpush.msra.mxu0 %v125
    %805 = vmatpush.msra.mxu0 %v123
    %806 = vmatpush.msra.mxu0 %v121
    %807 = vmatpush.msra.mxu0 %v119
    %808 = vmatpush.msra.mxu0 %v117
    %809 = vmatpush.msra.mxu0 %v115
    %810 = vmatpush.msra.mxu0 %v113
    %811 = vmatpush.msra.mxu0 %v111
    %812 = vmatmul.f32.gmra.mxu0 %v774
    %v813 = vpop.f32.mrf.mxu0
    %v814 = vadd.f32 0.0, %v813
    %815 = vdwg.mxu0
    %v817 = vrot.slane %v794, 6
    %v819 = vadd.f32 %v85, %v817
    %v821 = vrot.slane %v814, 4
    %v823 = vadd.f32 %v105, %v821
    %v824 = vxor.u32 %v819, 2147483648
    %v825 = vmul.f32 %v824, 1.442695
    %v826 = vpow.pop %v825
    %v827 = vadd.f32 %v826, 1.0
    %v828 = vrcp.pop %v827
    %v829 = vmul.f32 %v827, %v828
    %v830 = vsub.f32 1.0, %v829
    %v831 = vmul.f32 %v828, %v830
    %v832 = vadd.f32 %v828, %v831
    %vm833 = vweird.f32 %v827
    %vm834 = vweird.f32 %v828
    %vm835 = vmor %vm833, %vm834
    %v836 = vsel %vm835, %v828, %v832
    %v837 = vand.u32 2147483647, %v827
    %vm838 = vcmp.eq.f32.partialorder %v837, 8.507059e+37
    %v839 = vand.u32 %v827, 2147483648
    %v840 = vor.u32 1.1754944e-38, %v839
    %v841 = vsel %vm838, %v840, %v836
    %v842 = vmul.f32 1.0, %v841
    %v843 = vtanh.pop %v819
    %v845 = vrot.slane %v716, 6
    %v847 = vmul.f32 %v842, %v845
    %849 = vrot.lane.b32.xlu0 %v843, 32
    %v850 = vpop.permute.xlu0 %849
    %v852 = vmul.f32 %v842, %v850
    %854 = vrot.lane.b32.xlu0 %v852, 32
    %v855 = vpop.permute.xlu0 %854
    %v857 = vadd.f32 %v847, %v855
    %v858 = vtanh.pop %v857
    %860 = vrot.lane.b32.xlu0 %v858, 32
    %v861 = vpop.permute.xlu0 %860
    %v863 = vmul.f32 %v842, %v861
    %v864 = vxor.u32 %v823, 2147483648
    %v865 = vmul.f32 %v864, 1.442695
    %v866 = vpow.pop %v865
    %v867 = vadd.f32 %v866, 1.0
    %v868 = vrcp.pop %v867
    %v869 = vmul.f32 %v867, %v868
    %v870 = vsub.f32 1.0, %v869
    %v871 = vmul.f32 %v868, %v870
    %v872 = vadd.f32 %v868, %v871
    %vm873 = vweird.f32 %v867
    %vm874 = vweird.f32 %v868
    %vm875 = vmor %vm873, %vm874
    %v876 = vsel %vm875, %v868, %v872
    %v877 = vand.u32 2147483647, %v867
    %vm878 = vcmp.eq.f32.partialorder %v877, 8.507059e+37
    %v879 = vand.u32 %v867, 2147483648
    %v880 = vor.u32 1.1754944e-38, %v879
    %v881 = vsel %vm878, %v880, %v876
    %v882 = vmul.f32 1.0, %v881
    %v883 = vtanh.pop %v823
    %v885 = vrot.slane %v756, 2
    %v887 = vmul.f32 %v882, %v885
    %889 = vrot.lane.b32.xlu0 %v883, 32
    %v890 = vpop.permute.xlu0 %889
    %v892 = vmul.f32 %v882, %v890
    %894 = vrot.lane.b32.xlu0 %v892, 32
    %v895 = vpop.permute.xlu0 %894
    %v897 = vadd.f32 %v887, %v895
    %v898 = vtanh.pop %v897
    %900 = vrot.lane.b32.xlu0 %v898, 32
    %v901 = vpop.permute.xlu0 %900
    %v903 = vmul.f32 %v882, %v901
    %905 = vrot.lane.b32.xlu0 %v863, 64
    %v906 = vpop.permute.xlu0 %905
    %v909 = vrot.slane %v903, 2
    %910 = vrot.lane.b32.xlu0 %v909, 96
    %v911 = vpop.permute.xlu0 %910
    %v913 = vsel %vm209, %v906, %v911
    %v915 = vrot.slane %v913, 2
    %v916 = vsel %vm211, %v915, 0
    %918 = vmatpush.msra.mxu0 0.0
    %919 = vmatpush.msra.mxu0 0.0
    %920 = vmatpush.msra.mxu0 0.0
    %921 = vmatpush.msra.mxu0 0.0
    %922 = vmatpush.msra.mxu0 0.0
    %923 = vmatpush.msra.mxu0 0.0
    %924 = vmatpush.msra.mxu0 0.0
    %925 = vmatpush.msra.mxu0 0.0
    %926 = vmatpush.msra.mxu0 %v124
    %927 = vmatpush.msra.mxu0 %v122
    %928 = vmatpush.msra.mxu0 %v120
    %929 = vmatpush.msra.mxu0 %v118
    %930 = vmatpush.msra.mxu0 %v116
    %931 = vmatpush.msra.mxu0 %v114
    %932 = vmatpush.msra.mxu0 %v112
    %933 = vmatpush.msra.mxu0 %v110
    %934 = vmatmul.f32.gmra.mxu0 %v916
    %v935 = vpop.f32.mrf.mxu0
    %v936 = vadd.f32 0.0, %v935
    %937 = vdwg.mxu0
    %938 = vmatpush.msra.mxu0 0.0
    %939 = vmatpush.msra.mxu0 0.0
    %940 = vmatpush.msra.mxu0 0.0
    %941 = vmatpush.msra.mxu0 0.0
    %942 = vmatpush.msra.mxu0 0.0
    %943 = vmatpush.msra.mxu0 0.0
    %944 = vmatpush.msra.mxu0 0.0
    %945 = vmatpush.msra.mxu0 0.0
    %946 = vmatpush.msra.mxu0 %v125
    %947 = vmatpush.msra.mxu0 %v123
    %948 = vmatpush.msra.mxu0 %v121
    %949 = vmatpush.msra.mxu0 %v119
    %950 = vmatpush.msra.mxu0 %v117
    %951 = vmatpush.msra.mxu0 %v115
    %952 = vmatpush.msra.mxu0 %v113
    %953 = vmatpush.msra.mxu0 %v111
    %954 = vmatmul.f32.gmra.mxu0 %v916
    %v955 = vpop.f32.mrf.mxu0
    %v956 = vadd.f32 0.0, %v955
    %957 = vdwg.mxu0
    %v959 = vrot.slane %v936, 4
    %v961 = vadd.f32 %v85, %v959
    %v963 = vrot.slane %v956, 6
    %v965 = vadd.f32 %v105, %v963
    %v966 = vxor.u32 %v961, 2147483648
    %v967 = vmul.f32 %v966, 1.442695
    %v968 = vpow.pop %v967
    %v969 = vadd.f32 %v968, 1.0
    %v970 = vrcp.pop %v969
    %v971 = vmul.f32 %v969, %v970
    %v972 = vsub.f32 1.0, %v971
    %v973 = vmul.f32 %v970, %v972
    %v974 = vadd.f32 %v970, %v973
    %vm975 = vweird.f32 %v969
    %vm976 = vweird.f32 %v970
    %vm977 = vmor %vm975, %vm976
    %v978 = vsel %vm977, %v970, %v974
    %v979 = vand.u32 2147483647, %v969
    %vm980 = vcmp.eq.f32.partialorder %v979, 8.507059e+37
    %v981 = vand.u32 %v969, 2147483648
    %v982 = vor.u32 1.1754944e-38, %v981
    %v983 = vsel %vm980, %v982, %v978
    %v984 = vmul.f32 1.0, %v983
    %v985 = vtanh.pop %v961
    %v987 = vrot.slane %v857, 6
    %v989 = vmul.f32 %v984, %v987
    %991 = vrot.lane.b32.xlu0 %v985, 32
    %v992 = vpop.permute.xlu0 %991
    %v994 = vmul.f32 %v984, %v992
    %996 = vrot.lane.b32.xlu0 %v994, 32
    %v997 = vpop.permute.xlu0 %996
    %v999 = vadd.f32 %v989, %v997
    %v1000 = vtanh.pop %v999
    %1002 = vrot.lane.b32.xlu0 %v1000, 32
    %v1003 = vpop.permute.xlu0 %1002
    %v1005 = vmul.f32 %v984, %v1003
    %v1006 = vxor.u32 %v965, 2147483648
    %v1007 = vmul.f32 %v1006, 1.442695
    %v1008 = vpow.pop %v1007
    %v1009 = vadd.f32 %v1008, 1.0
    %v1010 = vrcp.pop %v1009
    %v1011 = vmul.f32 %v1009, %v1010
    %v1012 = vsub.f32 1.0, %v1011
    %v1013 = vmul.f32 %v1010, %v1012
    %v1014 = vadd.f32 %v1010, %v1013
    %vm1015 = vweird.f32 %v1009
    %vm1016 = vweird.f32 %v1010
    %vm1017 = vmor %vm1015, %vm1016
    %v1018 = vsel %vm1017, %v1010, %v1014
    %v1019 = vand.u32 2147483647, %v1009
    %vm1020 = vcmp.eq.f32.partialorder %v1019, 8.507059e+37
    %v1021 = vand.u32 %v1009, 2147483648
    %v1022 = vor.u32 1.1754944e-38, %v1021
    %v1023 = vsel %vm1020, %v1022, %v1018
    %v1024 = vmul.f32 1.0, %v1023
    %v1025 = vtanh.pop %v965
    %v1027 = vrot.slane %v897, 2
    %v1029 = vmul.f32 %v1024, %v1027
    %1031 = vrot.lane.b32.xlu0 %v1025, 32
    %v1032 = vpop.permute.xlu0 %1031
    %v1034 = vmul.f32 %v1024, %v1032
    %1036 = vrot.lane.b32.xlu0 %v1034, 32
    %v1037 = vpop.permute.xlu0 %1036
    %v1039 = vadd.f32 %v1029, %v1037
    %v1040 = vtanh.pop %v1039
    %1042 = vrot.lane.b32.xlu0 %v1040, 32
    %v1043 = vpop.permute.xlu0 %1042
    %v1045 = vmul.f32 %v1024, %v1043
    %1047 = vrot.lane.b32.xlu0 %v1005, 64
    %v1048 = vpop.permute.xlu0 %1047
    %v1051 = vrot.slane %v1045, 6
    %1052 = vrot.lane.b32.xlu0 %v1051, 96
    %v1053 = vpop.permute.xlu0 %1052
    %v1055 = vsel %vm209, %v1048, %v1053
    %v1057 = vrot.slane %v1055, 4
    %v1058 = vsel %vm211, %v1057, 0
    %1060 = vmatpush.msra.mxu0 0.0
    %1061 = vmatpush.msra.mxu0 0.0
    %1062 = vmatpush.msra.mxu0 0.0
    %1063 = vmatpush.msra.mxu0 0.0
    %1064 = vmatpush.msra.mxu0 0.0
    %1065 = vmatpush.msra.mxu0 0.0
    %1066 = vmatpush.msra.mxu0 0.0
    %1067 = vmatpush.msra.mxu0 0.0
    %1068 = vmatpush.msra.mxu0 %v124
    %1069 = vmatpush.msra.mxu0 %v122
    %1070 = vmatpush.msra.mxu0 %v120
    %1071 = vmatpush.msra.mxu0 %v118
    %1072 = vmatpush.msra.mxu0 %v116
    %1073 = vmatpush.msra.mxu0 %v114
    %1074 = vmatpush.msra.mxu0 %v112
    %1075 = vmatpush.msra.mxu0 %v110
    %1076 = vmatmul.f32.gmra.mxu0 %v1058
    %v1077 = vpop.f32.mrf.mxu0
    %v1078 = vadd.f32 0.0, %v1077
    %1079 = vdwg.mxu0
    %1080 = vmatpush.msra.mxu0 0.0
    %1081 = vmatpush.msra.mxu0 0.0
    %1082 = vmatpush.msra.mxu0 0.0
    %1083 = vmatpush.msra.mxu0 0.0
    %1084 = vmatpush.msra.mxu0 0.0
    %1085 = vmatpush.msra.mxu0 0.0
    %1086 = vmatpush.msra.mxu0 0.0
    %1087 = vmatpush.msra.mxu0 0.0
    %1088 = vmatpush.msra.mxu0 %v125
    %1089 = vmatpush.msra.mxu0 %v123
    %1090 = vmatpush.msra.mxu0 %v121
    %1091 = vmatpush.msra.mxu0 %v119
    %1092 = vmatpush.msra.mxu0 %v117
    %1093 = vmatpush.msra.mxu0 %v115
    %1094 = vmatpush.msra.mxu0 %v113
    %1095 = vmatpush.msra.mxu0 %v111
    %1096 = vmatmul.f32.gmra.mxu0 %v1058
    %v1097 = vpop.f32.mrf.mxu0
    %v1098 = vadd.f32 0.0, %v1097
    %1099 = vdwg.mxu0
    %v1101 = vrot.slane %v1078, 2
    %v1103 = vadd.f32 %v85, %v1101
    %v1104 = vadd.f32 %v105, %v1098
    %v1105 = vxor.u32 %v1103, 2147483648
    %v1106 = vmul.f32 %v1105, 1.442695
    %v1107 = vpow.pop %v1106
    %v1108 = vadd.f32 %v1107, 1.0
    %v1109 = vrcp.pop %v1108
    %v1110 = vmul.f32 %v1108, %v1109
    %v1111 = vsub.f32 1.0, %v1110
    %v1112 = vmul.f32 %v1109, %v1111
    %v1113 = vadd.f32 %v1109, %v1112
    %vm1114 = vweird.f32 %v1108
    %vm1115 = vweird.f32 %v1109
    %vm1116 = vmor %vm1114, %vm1115
    %v1117 = vsel %vm1116, %v1109, %v1113
    %v1118 = vand.u32 2147483647, %v1108
    %vm1119 = vcmp.eq.f32.partialorder %v1118, 8.507059e+37
    %v1120 = vand.u32 %v1108, 2147483648
    %v1121 = vor.u32 1.1754944e-38, %v1120
    %v1122 = vsel %vm1119, %v1121, %v1117
    %v1123 = vmul.f32 1.0, %v1122
    %v1124 = vtanh.pop %v1103
    %v1126 = vrot.slane %v999, 6
    %v1128 = vmul.f32 %v1123, %v1126
    %1130 = vrot.lane.b32.xlu0 %v1124, 32
    %v1131 = vpop.permute.xlu0 %1130
    %v1133 = vmul.f32 %v1123, %v1131
    %1135 = vrot.lane.b32.xlu0 %v1133, 32
    %v1136 = vpop.permute.xlu0 %1135
    %v1138 = vadd.f32 %v1128, %v1136
    %v1139 = vtanh.pop %v1138
    %1141 = vrot.lane.b32.xlu0 %v1139, 32
    %v1142 = vpop.permute.xlu0 %1141
    %v1144 = vmul.f32 %v1123, %v1142
    %v1145 = vxor.u32 %v1104, 2147483648
    %v1146 = vmul.f32 %v1145, 1.442695
    %v1147 = vpow.pop %v1146
    %v1148 = vadd.f32 %v1147, 1.0
    %v1149 = vrcp.pop %v1148
    %v1150 = vmul.f32 %v1148, %v1149
    %v1151 = vsub.f32 1.0, %v1150
    %v1152 = vmul.f32 %v1149, %v1151
    %v1153 = vadd.f32 %v1149, %v1152
    %vm1154 = vweird.f32 %v1148
    %vm1155 = vweird.f32 %v1149
    %vm1156 = vmor %vm1154, %vm1155
    %v1157 = vsel %vm1156, %v1149, %v1153
    %v1158 = vand.u32 2147483647, %v1148
    %vm1159 = vcmp.eq.f32.partialorder %v1158, 8.507059e+37
    %v1160 = vand.u32 %v1148, 2147483648
    %v1161 = vor.u32 1.1754944e-38, %v1160
    %v1162 = vsel %vm1159, %v1161, %v1157
    %v1163 = vmul.f32 1.0, %v1162
    %v1164 = vtanh.pop %v1104
    %v1166 = vrot.slane %v1039, 2
    %v1168 = vmul.f32 %v1163, %v1166
    %1170 = vrot.lane.b32.xlu0 %v1164, 32
    %v1171 = vpop.permute.xlu0 %1170
    %v1173 = vmul.f32 %v1163, %v1171
    %1175 = vrot.lane.b32.xlu0 %v1173, 32
    %v1176 = vpop.permute.xlu0 %1175
    %v1178 = vadd.f32 %v1168, %v1176
    %v1179 = vtanh.pop %v1178
    %1181 = vrot.lane.b32.xlu0 %v1179, 32
    %v1182 = vpop.permute.xlu0 %1181
    %v1184 = vmul.f32 %v1163, %v1182
    %v1185 = vld [vmem:[%s4] sm:$0x1]
    %s1186 = sld [smem:[#allocation2]]
    %1188 = vrot.lane.b32.xlu0 %v1184, 96
    %v1189 = vpop.permute.xlu0 %1188
    %v1191 = vsel %vm209, %v202, %v1189
    %v1193 = vperm.slane %v1185, 0
    %v1195 = vmul.f32 %v1191, %v1193
    %vm1196 = vcmask 517120
    %v1197 = vsel %vm1196, %v1195, 0.0
    %1198 = vadd.xlane.f32.xlu0 %v1197
    %v1199 = vpop.xlane.xlu0 %1198
    %1200 = vrot.lane.b32.xlu0 %v1045, 96
    %v1201 = vpop.permute.xlu0 %1200
    %v1203 = vsel %vm209, %v345, %v1201
    %v1204 = vmul.f32 %v1203, %v1193
    %vm1205 = vcmask 519170
    %v1206 = vsel %vm1205, %v1204, 0.0
    %1207 = vadd.xlane.f32.xlu0 %v1206
    %v1208 = vpop.xlane.xlu0 %1207
    %1209 = vrot.lane.b32.xlu0 %v903, 96
    %v1210 = vpop.permute.xlu0 %1209
    %v1212 = vsel %vm209, %v487, %v1210
    %v1213 = vmul.f32 %v1212, %v1193
    %vm1214 = vcmask 521220
    %v1215 = vsel %vm1214, %v1213, 0.0
    %1216 = vadd.xlane.f32.xlu0 %v1215
    %v1217 = vpop.xlane.xlu0 %1216
    %1218 = vrot.lane.b32.xlu0 %v762, 96
    %v1219 = vpop.permute.xlu0 %1218
    %v1221 = vsel %vm209, %v626, %v1219
    %v1222 = vmul.f32 %v1221, %v1193
    %vm1223 = vcmask 523270
    %v1224 = vsel %vm1223, %v1222, 0.0
    %1225 = vadd.xlane.f32.xlu0 %v1224
    %v1226 = vpop.xlane.xlu0 %1225
    %1227 = vrot.lane.b32.xlu0 %v623, 96
    %v1228 = vpop.permute.xlu0 %1227
    %v1230 = vsel %vm209, %v765, %v1228
    %v1231 = vmul.f32 %v1230, %v1193
    %v1232 = vsel %vm1196, %v1231, 0.0
    %1233 = vadd.xlane.f32.xlu0 %v1232
    %v1234 = vpop.xlane.xlu0 %1233
    %1235 = vrot.lane.b32.xlu0 %v484, 96
    %v1236 = vpop.permute.xlu0 %1235
    %v1238 = vsel %vm209, %v906, %v1236
    %v1239 = vmul.f32 %v1238, %v1193
    %v1240 = vsel %vm1205, %v1239, 0.0
    %1241 = vadd.xlane.f32.xlu0 %v1240
    %v1242 = vpop.xlane.xlu0 %1241
    %1243 = vrot.lane.b32.xlu0 %v342, 96
    %v1244 = vpop.permute.xlu0 %1243
    %v1246 = vsel %vm209, %v1048, %v1244
    %v1247 = vmul.f32 %v1246, %v1193
    %v1248 = vsel %vm1214, %v1247, 0.0
    %1249 = vadd.xlane.f32.xlu0 %v1248
    %v1250 = vpop.xlane.xlu0 %1249
    %1252 = vrot.lane.b32.xlu0 %v1144, 64
    %v1253 = vpop.permute.xlu0 %1252
    %1255 = vrot.lane.b32.xlu0 %v199, 96
    %v1256 = vpop.permute.xlu0 %1255
    %v1258 = vsel %vm209, %v1253, %v1256
    %v1259 = vmul.f32 %v1258, %v1193
    %v1260 = vsel %vm1223, %v1259, 0.0
    %1261 = vadd.xlane.f32.xlu0 %v1260
    %v1262 = vpop.xlane.xlu0 %1261
    %v1264 = vrot.slane %v1208, 2
    %v1267 = vrot.slane %v1217, 4
    %v1270 = vrot.slane %v1226, 6
    %v1273 = vrot.slane %v1242, 2
    %v1276 = vrot.slane %v1250, 4
    %v1279 = vrot.slane %v1262, 6
    %vm1281 = vcmask 7168
    %v1282 = vsel %vm1281, %v1199, %v1264
    %vm1283 = vcmask 15360
    %v1284 = vsel %vm1283, %v1282, %v1267
    %vm1285 = vcmask 23552
    %v1286 = vsel %vm1285, %v1284, %v1270
    %vm1287 = vcmask 31744
    %v1288 = vsel %vm1287, %v1286, %v1234
    %vm1289 = vcmask 39936
    %v1290 = vsel %vm1289, %v1288, %v1273
    %vm1291 = vcmask 48128
    %v1292 = vsel %vm1291, %v1290, %v1276
    %vm1293 = vcmask 56320
    %v1294 = vsel %vm1293, %v1292, %v1279
    %v1295 = vstv %s1186
    %v1296 = vadd.f32 %v1294, %v1295
    %vm1297 = vcmask 58368
    %v1298 = vsel %vm1297, %v1296, -inf
    %1299 = vmax.xlane.f32.xlu0 %v1298
    %v1300 = vpop.xlane.xlu0 %1299
    %v1301 = vsub.f32 %v1296, %v1300
    %v1302 = vmul.f32 %v1301, 1.442695
    %v1303 = vpow.pop %v1302
    %v1304 = vsel %vm1297, %v1303, 0.0
    %1305 = vadd.xlane.f32.xlu0 %v1304
    %v1306 = vpop.xlane.xlu0 %1305
    %v1307 = vrcp.pop %v1306
    %v1308 = vmul.f32 %v1306, %v1307
    %v1309 = vsub.f32 1.0, %v1308
    %v1310 = vmul.f32 %v1307, %v1309
    %v1311 = vadd.f32 %v1307, %v1310
    %vm1312 = vweird.f32 %v1306
    %vm1313 = vweird.f32 %v1307
    %vm1314 = vmor %vm1312, %vm1313
    %v1315 = vsel %vm1314, %v1307, %v1311
    %v1316 = vand.u32 2147483647, %v1306
    %vm1317 = vcmp.eq.f32.partialorder %v1316, 8.507059e+37
    %v1318 = vand.u32 %v1306, 2147483648
    %v1319 = vor.u32 1.1754944e-38, %v1318
    %v1320 = vsel %vm1317, %v1319, %v1315
    %v1321 = vmul.f32 %v1303, %v1320
    %1322 = vst.msk [vmem:[#allocation7] sm:$0x3] %vm1297, %v1321
    %1324 = vset.pattern.permute.xlu0 0
    %1325 = vperm.xlu0 %1324, %v1321
    %v1326 = vpop.permute.xlu0 %1325
    %v1328 = vmul.f32 %v1326, %v1191
    %1329 = vset.pattern.permute.xlu0 1
    %1330 = vperm.xlu0 %1329, %v1321
    %v1331 = vpop.permute.xlu0 %1330
    %v1334 = vrot.slane %v1203, 2
    %v1336 = vmul.f32 %v1331, %v1334
    %v1337 = vadd.f32 %v1328, %v1336
    %1338 = vset.pattern.permute.xlu0 2
    %1339 = vperm.xlu0 %1338, %v1321
    %v1340 = vpop.permute.xlu0 %1339
    %v1343 = vrot.slane %v1212, 4
    %v1345 = vmul.f32 %v1340, %v1343
    %v1346 = vadd.f32 %v1337, %v1345
    %1347 = vset.pattern.permute.xlu0 3
    %1348 = vperm.xlu0 %1347, %v1321
    %v1349 = vpop.permute.xlu0 %1348
    %v1352 = vrot.slane %v1221, 6
    %v1354 = vmul.f32 %v1349, %v1352
    %v1355 = vadd.f32 %v1346, %v1354
    %1356 = vset.pattern.permute.xlu0 4
    %1357 = vperm.xlu0 %1356, %v1321
    %v1358 = vpop.permute.xlu0 %1357
    %v1360 = vmul.f32 %v1358, %v1230
    %v1361 = vadd.f32 %v1355, %v1360
    %1362 = vset.pattern.permute.xlu0 5
    %1363 = vperm.xlu0 %1362, %v1321
    %v1364 = vpop.permute.xlu0 %1363
    %v1367 = vrot.slane %v1238, 2
    %v1369 = vmul.f32 %v1364, %v1367
    %v1370 = vadd.f32 %v1361, %v1369
    %1371 = vset.pattern.permute.xlu0 6
    %1372 = vperm.xlu0 %1371, %v1321
    %v1373 = vpop.permute.xlu0 %1372
    %v1376 = vrot.slane %v1246, 4
    %v1378 = vmul.f32 %v1373, %v1376
    %v1379 = vadd.f32 %v1370, %v1378
    %1380 = vset.pattern.permute.xlu0 7
    %1381 = vperm.xlu0 %1380, %v1321
    %v1382 = vpop.permute.xlu0 %1381
    %v1385 = vrot.slane %v1258, 6
    %v1387 = vmul.f32 %v1382, %v1385
    %v1388 = vadd.f32 %v1379, %v1387
    %1389 = vst.msk [vmem:[#allocation6] sm:$0x3] %vm1196, %v1388
    %1390 = vrot.lane.b32.xlu0 %v1334, 64
    %v1391 = vpop.permute.xlu0 %1390
    %1393 = vrot.lane.b32.xlu0 %v1352, 64
    %v1394 = vpop.permute.xlu0 %1393
    %1396 = vrot.lane.b32.xlu0 %v1367, 64
    %v1397 = vpop.permute.xlu0 %1396
    %1399 = vrot.lane.b32.xlu0 %v1385, 64
    %v1400 = vpop.permute.xlu0 %1399
    %v1402 = vsel %vm211, %v1191, %v1391
    %v1403 = vsel %vm211, %v1343, %v1394
    %v1404 = vsel %vm211, %v1230, %v1397
    %v1405 = vsel %vm211, %v1376, %v1400
    %v1410 = vrot.slane %v1403, 6
    %v1411 = vrot.slane %v1404, 4
    %v1412 = vrot.slane %v1405, 2
    %vm1413 = vcmask 1041408
    %v1414 = vsel %vm1413, %v1402, %v1410
    %vm1415 = vcmask 1045508
    %v1416 = vsel %vm1415, %v1411, %v1412
    %vm1417 = vcmask 1043456
    %v1418 = vsel %vm1417, %v1414, %v1416
    %1420 = vst [vmem:[%s8] sm:$0xff] %v1418
    // Predicated region
    $region30: #{lstm_attention_forward.1} parent=1 // pred_check
      _
    $region31: #{lstm_attention_forward.1} parent=1 // pred_check_branch
      %1422 = sbr.rel (0) target = $region33
    $region32: #{lstm_attention_forward.1} parent=1 // pred_region
      %1424 = vsyncadd [#allocation5], 0
      %s1426 = sshll.u32 [#allocation6], 4
      %s1427 = int_to_ptr.vmem [resolvable:$true] %s1426
      %s1428 = sshll.u32 %s6, 4
      %s1429 = int_to_ptr.hbm [resolvable:$true] %s1428
      %1431 = dma.vmem_to_hbm [thread:$0]  %s1427, 32, %s1429, [#allocation5]
    $region33: #{lstm_attention_forward.1} parent=1 // pred_fallthru
      _
    // Predicated region
    $region34: #{lstm_attention_forward.1} parent=1 // pred_check
      _
    $region35: #{lstm_attention_forward.1} parent=1 // pred_check_branch
      %1433 = sbr.rel (0) target = $region37
    $region36: #{lstm_attention_forward.1} parent=1 // pred_region
      %1435 = vsyncadd [#allocation8], 0
      %s1437 = sshll.u32 [#allocation7], 4
      %s1438 = int_to_ptr.vmem [resolvable:$true] %s1437
      %s1439 = sshll.u32 %s7, 4
      %s1440 = int_to_ptr.hbm [resolvable:$true] %s1439
      %1442 = dma.vmem_to_hbm [thread:$0]  %s1438, 32, %s1440, [#allocation8]
    $region37: #{lstm_attention_forward.1} parent=1 // pred_fallthru
      _
    // Predicated region
    $region38: #{lstm_attention_forward.1} parent=1 // pred_check
      _
    $region39: #{lstm_attention_forward.1} parent=1 // pred_check_branch
      %1444 = sbr.rel (0) target = $region41
    $region40: #{lstm_attention_forward.1} parent=1 // pred_region
      _
    $region41: #{lstm_attention_forward.1} parent=1 // pred_fallthru
      _
    // Predicated region
    $region42: #{lstm_attention_forward.1} parent=1 // pred_check
      _
    $region43: #{lstm_attention_forward.1} parent=1 // pred_check_branch
      %1446 = sbr.rel (0) target = $region45
    $region44: #{lstm_attention_forward.1} parent=1 // pred_region
      %1448 = dma.done [#allocation5], 32
    $region45: #{lstm_attention_forward.1} parent=1 // pred_fallthru
      _
    // Predicated region
    $region46: #{lstm_attention_forward.1} parent=1 // pred_check
      _
    $region47: #{lstm_attention_forward.1} parent=1 // pred_check_branch
      %1450 = sbr.rel (0) target = $region49
    $region48: #{lstm_attention_forward.1} parent=1 // pred_region
      %1452 = dma.done [#allocation8], 32
    $region49: #{lstm_attention_forward.1} parent=1 // pred_fallthru
      _
    // Predicated region
    $region50: #{lstm_attention_forward.1} parent=1 // pred_check
      _
    $region51: #{lstm_attention_forward.1} parent=1 // pred_check_branch
      %1454 = sbr.rel (0) target = $region53
    $region52: #{lstm_attention_forward.1} parent=1 // pred_region
      _
    $region53: #{lstm_attention_forward.1} parent=1 // pred_fallthru
      _
    %1455 = vsyncpa [#allocation4], 1
    %1456 = vsyncpa [#allocation5], 1
    %1457 = vsyncpa [#allocation8], 1

</llo_original>
